<compile_context>
chip_gen: v5e
topology: v5e:2x2
jax: 0.10.0
libtpu: 0.0.40
codegen_flags: <defaults>
</compile_context>

<pallas_src>
import jax
import jax.numpy as jnp
from jax import lax
from jax.experimental import pallas as pl
from jax.experimental.pallas import tpu as pltpu


# Target row count for each hoisted-projection matmul chunk.  At the small
# shapes used here this is a single matmul per layer (W*tile_n <= 512).
_PROJ_ROWS = 512


def _round_up(v, m):
    return -(-v // m) * m


def _is_v7x():
    try:
        kind = jax.devices()[0].device_kind.lower()
    except Exception:
        return False
    return ("v7" in kind) or ("tpu7" in kind) or ("7x" in kind)


def _vmem_bytes_estimate(W, F, H, L, tile_n, x_itemsize, mm_itemsize):
    """Rough VMEM footprint (padded to (8,128) tiles, default double-buffering)."""
    pn = _round_up(tile_n, 8)
    g4 = _round_up(4 * H, 128)
    hl = _round_up(H, 128)
    total = 2 * W * pn * _round_up(F, 128) * x_itemsize      # x tile (double-buffered)
    total += 2 * pn * hl * 4                                 # output tile
    fin = F
    for _ in range(L):
        w = (_round_up(fin, 8) * g4 + _round_up(H, 8) * g4) * mm_itemsize + 8 * g4 * 4
        total += 2 * w                                       # weights (double-buffered)
        fin = H
    total += W * pn * g4 * 4                                 # gates scratch (f32)
    n_bufs = 0 if L == 1 else (1 if L == 2 else 2)
    total += n_bufs * W * pn * hl * mm_itemsize              # ping-pong layer outputs
    return total


def _pick_tile_n(N, W, F, H, L, x_itemsize, mm_itemsize, *, max_tile=256):
    """Largest N-tile that satisfies the (8,128) rule, the register budget for
    the register-carried h/c, and the per-chip VMEM budget."""
    vmem_budget = (40 << 20) if _is_v7x() else (96 << 20)
    reg_budget = 96 * 1024                        # h + c in f32, well under 256 KiB vregs
    cands = [t for t in range(8, max_tile + 1, 8) if N % t == 0]
    if N <= max_tile:
        cands.append(N)                           # full-dim block is always legal
    if not cands:
        cands = [N]
    cands = sorted(set(cands))
    best = cands[0]
    for t in cands:
        if 2 * t * H * 4 > reg_budget:
            continue
        if _vmem_bytes_estimate(W, F, H, L, t, x_itemsize, mm_itemsize) > vmem_budget:
            continue
        best = t
    return best


def _dim_semantics(grid):
    if not _is_v7x():
        return (pltpu.PARALLEL, pltpu.PARALLEL)
    # v7x: 2 TensorCores/chip -- shard the grid axis with more iterations.
    core_axis = 0 if grid[0] >= grid[1] else 1
    sem = [pltpu.PARALLEL, pltpu.PARALLEL]
    sem[core_axis] = pltpu.CORE_PARALLEL
    return tuple(sem)


def _make_fused_lstm_kernel(num_layers, W, tile_n, H, fin0):
    """Kernel running ALL LSTM layers for one (batch, N-tile) block.

    Ref layout (built by the wrapper):
      args[0]             : x_ref     (W, tile_n, F)
      args[1 : 1+3L]      : per layer W_ih^T (Fin,4H), W_hh^T (H,4H), bias (1,4H)
      args[1+3L]          : out_ref   (tile_n, H)  last-step top-layer hidden
      args[2+3L]          : gates_sc  (W*tile_n, 4H) f32 hoisted input projection
      args[3+3L:]         : ping-pong (W*tile_n, H)  layer output sequences
    """
    n_bufs = 0 if num_layers == 1 else (1 if num_layers == 2 else 2)
    # Timesteps per projection matmul chunk (one chunk == one big matmul here).
    proj_t = max(1, min(W, _PROJ_ROWS // max(tile_n, 1)))

    def kernel(*args):
        x_ref = args[0]
        w_refs = args[1:1 + 3 * num_layers]
        out_ref = args[1 + 3 * num_layers]
        gates_sc = args[2 + 3 * num_layers]
        bufs = args[3 + 3 * num_layers:]
        assert len(bufs) == n_bufs

        # Lane mask for full-width gate activations (only profitable if the
        # whole 4H gate row fits one 128-lane vreg, e.g. H=32).
        if 4 * H <= 128:
            lane = lax.broadcasted_iota(jnp.int32, (tile_n, 4 * H), 1)
            g_lane = (lane >= 2 * H) & (lane < 3 * H)
        else:
            g_lane = None

        for l in range(num_layers):
            wih = w_refs[3 * l][...]          # (Fin, 4H)  matmul dtype
            whh = w_refs[3 * l + 1][...]      # (H,   4H)  matmul dtype
            bias = w_refs[3 * l + 2][...]     # (1,   4H)  f32
            cdtype = wih.dtype
            src_buf = None if l == 0 else bufs[(l - 1) % 2]
            is_last = l == num_layers - 1
            dst_buf = None if is_last else bufs[l % 2]

            # ---- hoisted input projection: large-M matmul(s), off the serial
            #      recurrent critical path; bias added once per chunk. --------
            for t0 in range(0, W, proj_t):
                t1 = min(W, t0 + proj_t)
                rows = (t1 - t0) * tile_n
                if l == 0:
                    blk = x_ref[pl.ds(t0, t1 - t0)].reshape(rows, fin0)
                else:
                    blk = src_buf[pl.ds(t0 * tile_n, rows), :]
                gates_sc[pl.ds(t0 * tile_n, rows), :] = (
                    jnp.dot(blk.astype(cdtype), wih,
                            preferred_element_type=jnp.float32) + bias)

            # ---- serial recurrence: only h @ W_hh + gate math on the critical
            #      path.  h/c are value-carried (tile_n*H is kept small enough
            #      by _pick_tile_n that this does not spill). ------------------
            h = jnp.zeros((tile_n, H), jnp.float32)
            c = jnp.zeros((tile_n, H), jnp.float32)
            for t in range(W):
                g_pre = gates_sc[pl.ds(t * tile_n, tile_n), :] + jnp.dot(
                    h.astype(cdtype), whh, preferred_element_type=jnp.float32)
                if g_lane is not None:
                    # Full-128-lane activation: sigmoid everywhere, tanh on the
                    # g lanes, selected by the hoisted lane mask.
                    act = jnp.where(g_lane, jnp.tanh(g_pre), jax.nn.sigmoid(g_pre))
                    i_g = act[:, :H]
                    f_g = act[:, H:2 * H]
                    g_g = act[:, 2 * H:3 * H]
                    o_g = act[:, 3 * H:]
                else:
                    sig_if = jax.nn.sigmoid(g_pre[:, :2 * H])     # i,f in one slice
                    i_g = sig_if[:, :H]
                    f_g = sig_if[:, H:]
                    g_g = jnp.tanh(g_pre[:, 2 * H:3 * H])
                    o_g = jax.nn.sigmoid(g_pre[:, 3 * H:])
                c = f_g * c + i_g * g_g
                h = o_g * jnp.tanh(c)
                if dst_buf is not None:
                    dst_buf[pl.ds(t * tile_n, tile_n), :] = h.astype(dst_buf.dtype)

            if is_last:
                out_ref[...] = h.astype(out_ref.dtype)

    return kernel


def sequential_embedding(x, params, *, tile_n=None, matmul_dtype=jnp.bfloat16):
    """x: (B, W, N, F) in the original PyTorch layout.

    params: list (one per LSTM layer) of (W_ih^T (Fin,4H), W_hh^T (H,4H),
    b_ih + b_hh (4H,)), gate order [i, f, g, o].

    matmul_dtype: dtype of the MXU operands (weights / activations).  bf16 by
    default (f32 accumulation, f32 cell state & nonlinearities); pass
    jnp.float32 for an exact-f32 path.

    Returns (B, N, H): top-layer hidden at the last timestep.
    """
    B, W, N, F = x.shape
    H = params[0][1].shape[0]
    L = len(params)
    matmul_dtype = jnp.dtype(matmul_dtype)

    if tile_n is None:
        tile_n = _pick_tile_n(N, W, F, H, L, x.dtype.itemsize, matmul_dtype.itemsize)
    assert N % tile_n == 0, (N, tile_n)
    assert tile_n == N or tile_n % 8 == 0, tile_n

    grid = (B, N // tile_n)
    kernel = _make_fused_lstm_kernel(L, W, tile_n, H, F)

    # Input read straight from the (B, W, N, F) HBM layout: one (W, tile_n, F)
    # tile per grid point (batch dim squeezed) -- no wrapper-side HBM reshuffle.
    in_specs = [pl.BlockSpec((None, W, tile_n, F), lambda b, n: (b, 0, n, 0))]
    flat_args = [x]
    for (wih_t, whh_t, b) in params:
        fin = wih_t.shape[0]
        # Constant index maps: weights are DMA'd once and reused across grid steps.
        # TODO(synk): add pipeline_mode=pl.Buffered(1) here to drop the unused
        # second weight buffer once validated on the target stack (v7x VMEM win).
        in_specs.append(pl.BlockSpec((fin, 4 * H), lambda b, n: (0, 0)))
        in_specs.append(pl.BlockSpec((H, 4 * H), lambda b, n: (0, 0)))
        in_specs.append(pl.BlockSpec((1, 4 * H), lambda b, n: (0, 0)))
        flat_args += [wih_t.astype(matmul_dtype), whh_t.astype(matmul_dtype),
                      b.reshape(1, 4 * H).astype(jnp.float32)]

    n_bufs = 0 if L == 1 else (1 if L == 2 else 2)
    # Pre-activation gates stay f32 (bf16 here would hurt numerics); the
    # inter-layer sequence buffers carry the matmul operand dtype.
    scratch = [pltpu.VMEM((W * tile_n, 4 * H), jnp.float32)]
    scratch += [pltpu.VMEM((W * tile_n, H), matmul_dtype) for _ in range(n_bufs)]

    est = _vmem_bytes_estimate(W, F, H, L, tile_n, x.dtype.itemsize, matmul_dtype.itemsize)
    cap = (48 << 20) if _is_v7x() else (100 << 20)
    want = est * 3 // 2 + (1 << 20)
    vmem_limit = min(want, cap) if want > (16 << 20) else None

    out_shape = jax.ShapeDtypeStruct((B, N, H), jnp.float32)
    # TODO(synk): if production H stays < 128, pack several N-tiles into one
    # lane-dense (>=128) output slab to avoid masked vst on writeback.
    out_spec = pl.BlockSpec((None, tile_n, H), lambda b, n: (b, n, 0))

    def build(dim_sem):
        return pl.pallas_call(
            kernel,
            out_shape=out_shape,
            grid_spec=pltpu.PrefetchScalarGridSpec(
                num_scalar_prefetch=0,
                grid=grid,
                in_specs=in_specs,
                out_specs=out_spec,
                scratch_shapes=scratch,
            ),
            compiler_params=pltpu.CompilerParams(
                dimension_semantics=dim_sem,
                vmem_limit_bytes=vmem_limit,
            ),
        )

    dim_sem = _dim_semantics(grid)
    try:
        return build(dim_sem)(*flat_args)
    except Exception:
        if pltpu.CORE_PARALLEL in dim_sem:
            # v7x CORE_PARALLEL is best-effort; fall back to single-core-safe
            # semantics rather than failing the forward pass.
            return build((pltpu.PARALLEL,) * len(grid))(*flat_args)
        raise


def sequential_embedding_ref(x, params):
    """Pure-JAX reference (lax.scan LSTM), for correctness check only."""
    B, W, N, F = x.shape
    seq = jnp.transpose(x, (0, 2, 1, 3)).reshape(B * N, W, F)
    h_seq = seq
    for (wih_t, whh_t, b) in params:
        M = h_seq.shape[0]
        H = whh_t.shape[0]

        def step(carry, x_t):
            h, c = carry
            gates = x_t @ wih_t + h @ whh_t + b
            i_g = jax.nn.sigmoid(gates[:, 0:H])
            f_g = jax.nn.sigmoid(gates[:, H:2 * H])
            g_g = jnp.tanh(gates[:, 2 * H:3 * H])
            o_g = jax.nn.sigmoid(gates[:, 3 * H:4 * H])
            c = f_g * c + i_g * g_g
            h = o_g * jnp.tanh(c)
            return (h, c), h

        init = (jnp.zeros((M, H), jnp.float32), jnp.zeros((M, H), jnp.float32))
        (_, _), outs = lax.scan(step, init, jnp.transpose(h_seq, (1, 0, 2)))
        h_seq = jnp.transpose(outs, (1, 0, 2))
    last = h_seq[:, -1, :]
    return last.reshape(B, N, -1)


def make_lstm_params(key, n_features, hidden, num_layers):
    """PyTorch-style LSTM init: U(-1/sqrt(H), 1/sqrt(H)), gate order [i,f,g,o].

    Weights are stored transposed; the two biases are pre-summed (b_ih + b_hh).
    """
    bound = 1.0 / (hidden ** 0.5)
    params = []
    fin = n_features
    for _ in range(num_layers):
        key, k1, k2, k3, k4 = jax.random.split(key, 5)
        wih = jax.random.uniform(k1, (4 * hidden, fin), jnp.float32, -bound, bound)
        whh = jax.random.uniform(k2, (4 * hidden, hidden), jnp.float32, -bound, bound)
        bih = jax.random.uniform(k3, (4 * hidden,), jnp.float32, -bound, bound)
        bhh = jax.random.uniform(k4, (4 * hidden,), jnp.float32, -bound, bound)
        params.append((wih.T, whh.T, bih + bhh))
        fin = hidden
    return params


if __name__ == "__main__":
    # Small shapes consistent with the module: (batch, window, N stocks, features)
    B, W, N, F = 2, 8, 16, 4
    seq_embed_size = 32
    lstm_layers = 2

    root = jax.random.PRNGKey(0)
    k_x, k_p = jax.random.split(root)
    x = jax.random.normal(k_x, (B, W, N, F), dtype=jnp.float32)
    params = make_lstm_params(k_p, F, seq_embed_size, lstm_layers)

    ref = sequential_embedding_ref(x, params)

    # 1) Exact-f32 path: verifies the fused-kernel algorithm tightly.
    out_f32 = jax.block_until_ready(
        sequential_embedding(x, params, matmul_dtype=jnp.float32))
    assert out_f32.shape == (B, N, seq_embed_size), out_f32.shape
    assert jnp.allclose(out_f32, ref, rtol=1e-4, atol=1e-5), float(
        jnp.max(jnp.abs(out_f32 - ref)))

    # 2) Production path: bf16 MXU operands, f32 accumulation / cell state.
    out = jax.block_until_ready(sequential_embedding(x, params))
    assert out.shape == (B, N, seq_embed_size), out.shape
    assert jnp.allclose(out, ref, rtol=2e-2, atol=2e-2), float(
        jnp.max(jnp.abs(out - ref)))

    print("KERNEL_OK")
</pallas_src>

<mosaic_0001>
module attributes {stable_mosaic.version = 11 : i64} {
  func.func @kernel(%arg0: i32, %arg1: i32, %arg2: memref<1x8x16x4xf32, #tpu.memory_space<vmem>>, %arg3: memref<4x128xf32, #tpu.memory_space<vmem>>, %arg4: memref<32x128xf32, #tpu.memory_space<vmem>>, %arg5: memref<1x128xf32, #tpu.memory_space<vmem>>, %arg6: memref<32x128xf32, #tpu.memory_space<vmem>>, %arg7: memref<32x128xf32, #tpu.memory_space<vmem>>, %arg8: memref<1x128xf32, #tpu.memory_space<vmem>>, %arg9: memref<1x16x32xf32, #tpu.memory_space<vmem>>, %arg10: memref<128x128xf32, #tpu.memory_space<vmem>>, %arg11: memref<128x32xf32, #tpu.memory_space<vmem>>) attributes {dimension_semantics = [#tpu.dimension_semantics<parallel>, #tpu.dimension_semantics<parallel>], iteration_bounds = array<i64: 2, 1>, scalar_prefetch = 0 : i64, scratch_operands = 2 : i64, tpu.core_type = #tpu.core_type<tc>, window_params = [{transform_indices = @transform_0, window_bounds = array<i64: 1, 8, 16, 4>}, {pipeline_mode = #tpu.pipeline_mode<synchronous>, transform_indices = @transform_1, window_bounds = array<i64: 4, 128>}, {pipeline_mode = #tpu.pipeline_mode<synchronous>, transform_indices = @transform_2, window_bounds = array<i64: 32, 128>}, {pipeline_mode = #tpu.pipeline_mode<synchronous>, transform_indices = @transform_3, window_bounds = array<i64: 1, 128>}, {pipeline_mode = #tpu.pipeline_mode<synchronous>, transform_indices = @transform_4, window_bounds = array<i64: 32, 128>}, {pipeline_mode = #tpu.pipeline_mode<synchronous>, transform_indices = @transform_5, window_bounds = array<i64: 32, 128>}, {pipeline_mode = #tpu.pipeline_mode<synchronous>, transform_indices = @transform_6, window_bounds = array<i64: 1, 128>}, {transform_indices = @transform_7, window_bounds = array<i64: 1, 16, 32>}]} {
    %0 = tpu.iota {dimensions = array<i32: 1>} : vector<16x128xi32>
    %c64_i32 = arith.constant 64 : i32
    %1 = vector.broadcast %c64_i32 : i32 to vector<16x128xi32>
    %2 = arith.cmpi sge, %0, %1 : vector<16x128xi32>
    %c96_i32 = arith.constant 96 : i32
    %3 = vector.broadcast %c96_i32 : i32 to vector<16x128xi32>
    %4 = arith.cmpi slt, %0, %3 : vector<16x128xi32>
    %5 = arith.andi %2, %4 : vector<16x128xi1>
    %c0 = arith.constant 0 : index
    %c0_0 = arith.constant 0 : index
    %6 = vector.load %arg3[%c0, %c0_0] : memref<4x128xf32, #tpu.memory_space<vmem>>, vector<4x128xf32>
    %c0_1 = arith.constant 0 : index
    %c0_2 = arith.constant 0 : index
    %7 = vector.load %arg4[%c0_1, %c0_2] : memref<32x128xf32, #tpu.memory_space<vmem>>, vector<32x128xf32>
    %c0_3 = arith.constant 0 : index
    %c0_4 = arith.constant 0 : index
    %8 = vector.load %arg5[%c0_3, %c0_4] : memref<1x128xf32, #tpu.memory_space<vmem>>, vector<1x128xf32>
    %c0_5 = arith.constant 0 : index
    %c0_6 = arith.constant 0 : index
    %c0_7 = arith.constant 0 : index
    %c0_8 = arith.constant 0 : index
    %9 = vector.load %arg2[%c0_5, %c0_6, %c0_7, %c0_8] : memref<1x8x16x4xf32, #tpu.memory_space<vmem>>, vector<1x8x16x4xf32>
    %10 = vector.shape_cast %9 : vector<1x8x16x4xf32> to vector<8x16x4xf32>
    %11 = vector.shape_cast %10 : vector<8x16x4xf32> to vector<128x4xf32>
    %cst = arith.constant dense<0.000000e+00> : vector<128x128xf32>
    %12 = tpu.matmul %11, %6, %cst {dimension_numbers = #tpu.dot_dimension_numbers<[1], [0], [0], [1], [0, 0, 1, 1], [], []>} : vector<128x4xf32>, vector<4x128xf32>, vector<128x128xf32> -> vector<128x128xf32>
    %13 = vector.broadcast %8 : vector<1x128xf32> to vector<128x128xf32>
    %14 = arith.addf %12, %13 : vector<128x128xf32>
    %c0_9 = arith.constant 0 : index
    %c0_10 = arith.constant 0 : index
    %15 = vector.load %arg10[%c0_9, %c0_10] : memref<128x128xf32, #tpu.memory_space<vmem>>, vector<128x128xf32>
    tpu.vector_store %arg10[%c0_9, %c0_10], %14 {strides = array<i32>} : memref<128x128xf32, #tpu.memory_space<vmem>>, vector<128x128xf32>,
    %cst_11 = arith.constant 0.000000e+00 : f32
    %16 = vector.broadcast %cst_11 : f32 to vector<16x32xf32>
    %cst_12 = arith.constant 0.000000e+00 : f32
    %17 = vector.broadcast %cst_12 : f32 to vector<16x32xf32>
    %c0_13 = arith.constant 0 : index
    %c0_14 = arith.constant 0 : index
    %18 = vector.load %arg10[%c0_13, %c0_14] : memref<128x128xf32, #tpu.memory_space<vmem>>, vector<16x128xf32>
    %cst_15 = arith.constant dense<0.000000e+00> : vector<16x128xf32>
    %19 = tpu.matmul %16, %7, %cst_15 {dimension_numbers = #tpu.dot_dimension_numbers<[1], [0], [0], [1], [0, 0, 1, 1], [], []>} : vector<16x32xf32>, vector<32x128xf32>, vector<16x128xf32> -> vector<16x128xf32>
    %20 = arith.addf %18, %19 : vector<16x128xf32>
    %21 = math.tanh %20 : vector<16x128xf32>
    %22 = arith.negf %20 : vector<16x128xf32>
    %23 = math.exp %22 : vector<16x128xf32>
    %cst_16 = arith.constant 1.000000e+00 : f32
    %24 = vector.broadcast %cst_16 : f32 to vector<16x128xf32>
    %25 = arith.addf %24, %23 : vector<16x128xf32>
    %26 = arith.divf %24, %25 : vector<16x128xf32>
    %27 = arith.select %5, %21, %26 : vector<16x128xi1>, vector<16x128xf32>
    %28 = vector.extract_strided_slice %27 {offsets = [0, 0], sizes = [16, 32], strides = [1, 1]} : vector<16x128xf32> to vector<16x32xf32>
    %29 = vector.extract_strided_slice %27 {offsets = [0, 32], sizes = [16, 32], strides = [1, 1]} : vector<16x128xf32> to vector<16x32xf32>
    %30 = vector.extract_strided_slice %27 {offsets = [0, 64], sizes = [16, 32], strides = [1, 1]} : vector<16x128xf32> to vector<16x32xf32>
    %31 = vector.extract_strided_slice %27 {offsets = [0, 96], sizes = [16, 32], strides = [1, 1]} : vector<16x128xf32> to vector<16x32xf32>
    %32 = arith.mulf %29, %17 : vector<16x32xf32>
    %33 = arith.mulf %28, %30 : vector<16x32xf32>
    %34 = arith.addf %32, %33 : vector<16x32xf32>
    %35 = math.tanh %34 : vector<16x32xf32>
    %36 = arith.mulf %31, %35 : vector<16x32xf32>
    %c0_17 = arith.constant 0 : index
    %c0_18 = arith.constant 0 : index
    %37 = vector.load %arg11[%c0_17, %c0_18] : memref<128x32xf32, #tpu.memory_space<vmem>>, vector<16x32xf32>
    tpu.vector_store %arg11[%c0_17, %c0_18], %36 {strides = array<i32>} : memref<128x32xf32, #tpu.memory_space<vmem>>, vector<16x32xf32>,
    %c16 = arith.constant 16 : index
    %c0_19 = arith.constant 0 : index
    %38 = vector.load %arg10[%c16, %c0_19] : memref<128x128xf32, #tpu.memory_space<vmem>>, vector<16x128xf32>
    %cst_20 = arith.constant dense<0.000000e+00> : vector<16x128xf32>
    %39 = tpu.matmul %36, %7, %cst_20 {dimension_numbers = #tpu.dot_dimension_numbers<[1], [0], [0], [1], [0, 0, 1, 1], [], []>} : vector<16x32xf32>, vector<32x128xf32>, vector<16x128xf32> -> vector<16x128xf32>
    %40 = arith.addf %38, %39 : vector<16x128xf32>
    %41 = math.tanh %40 : vector<16x128xf32>
    %42 = arith.negf %40 : vector<16x128xf32>
    %43 = math.exp %42 : vector<16x128xf32>
    %cst_21 = arith.constant 1.000000e+00 : f32
    %44 = vector.broadcast %cst_21 : f32 to vector<16x128xf32>
    %45 = arith.addf %44, %43 : vector<16x128xf32>
    %46 = arith.divf %44, %45 : vector<16x128xf32>
    %47 = arith.select %5, %41, %46 : vector<16x128xi1>, vector<16x128xf32>
    %48 = vector.extract_strided_slice %47 {offsets = [0, 0], sizes = [16, 32], strides = [1, 1]} : vector<16x128xf32> to vector<16x32xf32>
    %49 = vector.extract_strided_slice %47 {offsets = [0, 32], sizes = [16, 32], strides = [1, 1]} : vector<16x128xf32> to vector<16x32xf32>
    %50 = vector.extract_strided_slice %47 {offsets = [0, 64], sizes = [16, 32], strides = [1, 1]} : vector<16x128xf32> to vector<16x32xf32>
    %51 = vector.extract_strided_slice %47 {offsets = [0, 96], sizes = [16, 32], strides = [1, 1]} : vector<16x128xf32> to vector<16x32xf32>
    %52 = arith.mulf %49, %34 : vector<16x32xf32>
    %53 = arith.mulf %48, %50 : vector<16x32xf32>
    %54 = arith.addf %52, %53 : vector<16x32xf32>
    %55 = math.tanh %54 : vector<16x32xf32>
    %56 = arith.mulf %51, %55 : vector<16x32xf32>
    %c16_22 = arith.constant 16 : index
    %c0_23 = arith.constant 0 : index
    %57 = vector.load %arg11[%c16_22, %c0_23] : memref<128x32xf32, #tpu.memory_space<vmem>>, vector<16x32xf32>
    tpu.vector_store %arg11[%c16_22, %c0_23], %56 {strides = array<i32>} : memref<128x32xf32, #tpu.memory_space<vmem>>, vector<16x32xf32>,
    %c32 = arith.constant 32 : index
    %c0_24 = arith.constant 0 : index
    %58 = vector.load %arg10[%c32, %c0_24] : memref<128x128xf32, #tpu.memory_space<vmem>>, vector<16x128xf32>
    %cst_25 = arith.constant dense<0.000000e+00> : vector<16x128xf32>
    %59 = tpu.matmul %56, %7, %cst_25 {dimension_numbers = #tpu.dot_dimension_numbers<[1], [0], [0], [1], [0, 0, 1, 1], [], []>} : vector<16x32xf32>, vector<32x128xf32>, vector<16x128xf32> -> vector<16x128xf32>
    %60 = arith.addf %58, %59 : vector<16x128xf32>
    %61 = math.tanh %60 : vector<16x128xf32>
    %62 = arith.negf %60 : vector<16x128xf32>
    %63 = math.exp %62 : vector<16x128xf32>
    %cst_26 = arith.constant 1.000000e+00 : f32
    %64 = vector.broadcast %cst_26 : f32 to vector<16x128xf32>
    %65 = arith.addf %64, %63 : vector<16x128xf32>
    %66 = arith.divf %64, %65 : vector<16x128xf32>
    %67 = arith.select %5, %61, %66 : vector<16x128xi1>, vector<16x128xf32>
    %68 = vector.extract_strided_slice %67 {offsets = [0, 0], sizes = [16, 32], strides = [1, 1]} : vector<16x128xf32> to vector<16x32xf32>
    %69 = vector.extract_strided_slice %67 {offsets = [0, 32], sizes = [16, 32], strides = [1, 1]} : vector<16x128xf32> to vector<16x32xf32>
    %70 = vector.extract_strided_slice %67 {offsets = [0, 64], sizes = [16, 32], strides = [1, 1]} : vector<16x128xf32> to vector<16x32xf32>
    %71 = vector.extract_strided_slice %67 {offsets = [0, 96], sizes = [16, 32], strides = [1, 1]} : vector<16x128xf32> to vector<16x32xf32>
    %72 = arith.mulf %69, %54 : vector<16x32xf32>
    %73 = arith.mulf %68, %70 : vector<16x32xf32>
    %74 = arith.addf %72, %73 : vector<16x32xf32>
    %75 = math.tanh %74 : vector<16x32xf32>
    %76 = arith.mulf %71, %75 : vector<16x32xf32>
    %c32_27 = arith.constant 32 : index
    %c0_28 = arith.constant 0 : index
    %77 = vector.load %arg11[%c32_27, %c0_28] : memref<128x32xf32, #tpu.memory_space<vmem>>, vector<16x32xf32>
    tpu.vector_store %arg11[%c32_27, %c0_28], %76 {strides = array<i32>} : memref<128x32xf32, #tpu.memory_space<vmem>>, vector<16x32xf32>,
    %c48 = arith.constant 48 : index
    %c0_29 = arith.constant 0 : index
    %78 = vector.load %arg10[%c48, %c0_29] : memref<128x128xf32, #tpu.memory_space<vmem>>, vector<16x128xf32>
    %cst_30 = arith.constant dense<0.000000e+00> : vector<16x128xf32>
    %79 = tpu.matmul %76, %7, %cst_30 {dimension_numbers = #tpu.dot_dimension_numbers<[1], [0], [0], [1], [0, 0, 1, 1], [], []>} : vector<16x32xf32>, vector<32x128xf32>, vector<16x128xf32> -> vector<16x128xf32>
    %80 = arith.addf %78, %79 : vector<16x128xf32>
    %81 = math.tanh %80 : vector<16x128xf32>
    %82 = arith.negf %80 : vector<16x128xf32>
    %83 = math.exp %82 : vector<16x128xf32>
    %cst_31 = arith.constant 1.000000e+00 : f32
    %84 = vector.broadcast %cst_31 : f32 to vector<16x128xf32>
    %85 = arith.addf %84, %83 : vector<16x128xf32>
    %86 = arith.divf %84, %85 : vector<16x128xf32>
    %87 = arith.select %5, %81, %86 : vector<16x128xi1>, vector<16x128xf32>
    %88 = vector.extract_strided_slice %87 {offsets = [0, 0], sizes = [16, 32], strides = [1, 1]} : vector<16x128xf32> to vector<16x32xf32>
    %89 = vector.extract_strided_slice %87 {offsets = [0, 32], sizes = [16, 32], strides = [1, 1]} : vector<16x128xf32> to vector<16x32xf32>
    %90 = vector.extract_strided_slice %87 {offsets = [0, 64], sizes = [16, 32], strides = [1, 1]} : vector<16x128xf32> to vector<16x32xf32>
    %91 = vector.extract_strided_slice %87 {offsets = [0, 96], sizes = [16, 32], strides = [1, 1]} : vector<16x128xf32> to vector<16x32xf32>
    %92 = arith.mulf %89, %74 : vector<16x32xf32>
    %93 = arith.mulf %88, %90 : vector<16x32xf32>
    %94 = arith.addf %92, %93 : vector<16x32xf32>
    %95 = math.tanh %94 : vector<16x32xf32>
    %96 = arith.mulf %91, %95 : vector<16x32xf32>
    %c48_32 = arith.constant 48 : index
    %c0_33 = arith.constant 0 : index
    %97 = vector.load %arg11[%c48_32, %c0_33] : memref<128x32xf32, #tpu.memory_space<vmem>>, vector<16x32xf32>
    tpu.vector_store %arg11[%c48_32, %c0_33], %96 {strides = array<i32>} : memref<128x32xf32, #tpu.memory_space<vmem>>, vector<16x32xf32>,
    %c64 = arith.constant 64 : index
    %c0_34 = arith.constant 0 : index
    %98 = vector.load %arg10[%c64, %c0_34] : memref<128x128xf32, #tpu.memory_space<vmem>>, vector<16x128xf32>
    %cst_35 = arith.constant dense<0.000000e+00> : vector<16x128xf32>
    %99 = tpu.matmul %96, %7, %cst_35 {dimension_numbers = #tpu.dot_dimension_numbers<[1], [0], [0], [1], [0, 0, 1, 1], [], []>} : vector<16x32xf32>, vector<32x128xf32>, vector<16x128xf32> -> vector<16x128xf32>
    %100 = arith.addf %98, %99 : vector<16x128xf32>
    %101 = math.tanh %100 : vector<16x128xf32>
    %102 = arith.negf %100 : vector<16x128xf32>
    %103 = math.exp %102 : vector<16x128xf32>
    %cst_36 = arith.constant 1.000000e+00 : f32
    %104 = vector.broadcast %cst_36 : f32 to vector<16x128xf32>
    %105 = arith.addf %104, %103 : vector<16x128xf32>
    %106 = arith.divf %104, %105 : vector<16x128xf32>
    %107 = arith.select %5, %101, %106 : vector<16x128xi1>, vector<16x128xf32>
    %108 = vector.extract_strided_slice %107 {offsets = [0, 0], sizes = [16, 32], strides = [1, 1]} : vector<16x128xf32> to vector<16x32xf32>
    %109 = vector.extract_strided_slice %107 {offsets = [0, 32], sizes = [16, 32], strides = [1, 1]} : vector<16x128xf32> to vector<16x32xf32>
    %110 = vector.extract_strided_slice %107 {offsets = [0, 64], sizes = [16, 32], strides = [1, 1]} : vector<16x128xf32> to vector<16x32xf32>
    %111 = vector.extract_strided_slice %107 {offsets = [0, 96], sizes = [16, 32], strides = [1, 1]} : vector<16x128xf32> to vector<16x32xf32>
    %112 = arith.mulf %109, %94 : vector<16x32xf32>
    %113 = arith.mulf %108, %110 : vector<16x32xf32>
    %114 = arith.addf %112, %113 : vector<16x32xf32>
    %115 = math.tanh %114 : vector<16x32xf32>
    %116 = arith.mulf %111, %115 : vector<16x32xf32>
    %c64_37 = arith.constant 64 : index
    %c0_38 = arith.constant 0 : index
    %117 = vector.load %arg11[%c64_37, %c0_38] : memref<128x32xf32, #tpu.memory_space<vmem>>, vector<16x32xf32>
    tpu.vector_store %arg11[%c64_37, %c0_38], %116 {strides = array<i32>} : memref<128x32xf32, #tpu.memory_space<vmem>>, vector<16x32xf32>,
    %c80 = arith.constant 80 : index
    %c0_39 = arith.constant 0 : index
    %118 = vector.load %arg10[%c80, %c0_39] : memref<128x128xf32, #tpu.memory_space<vmem>>, vector<16x128xf32>
    %cst_40 = arith.constant dense<0.000000e+00> : vector<16x128xf32>
    %119 = tpu.matmul %116, %7, %cst_40 {dimension_numbers = #tpu.dot_dimension_numbers<[1], [0], [0], [1], [0, 0, 1, 1], [], []>} : vector<16x32xf32>, vector<32x128xf32>, vector<16x128xf32> -> vector<16x128xf32>
    %120 = arith.addf %118, %119 : vector<16x128xf32>
    %121 = math.tanh %120 : vector<16x128xf32>
    %122 = arith.negf %120 : vector<16x128xf32>
    %123 = math.exp %122 : vector<16x128xf32>
    %cst_41 = arith.constant 1.000000e+00 : f32
    %124 = vector.broadcast %cst_41 : f32 to vector<16x128xf32>
    %125 = arith.addf %124, %123 : vector<16x128xf32>
    %126 = arith.divf %124, %125 : vector<16x128xf32>
    %127 = arith.select %5, %121, %126 : vector<16x128xi1>, vector<16x128xf32>
    %128 = vector.extract_strided_slice %127 {offsets = [0, 0], sizes = [16, 32], strides = [1, 1]} : vector<16x128xf32> to vector<16x32xf32>
    %129 = vector.extract_strided_slice %127 {offsets = [0, 32], sizes = [16, 32], strides = [1, 1]} : vector<16x128xf32> to vector<16x32xf32>
    %130 = vector.extract_strided_slice %127 {offsets = [0, 64], sizes = [16, 32], strides = [1, 1]} : vector<16x128xf32> to vector<16x32xf32>
    %131 = vector.extract_strided_slice %127 {offsets = [0, 96], sizes = [16, 32], strides = [1, 1]} : vector<16x128xf32> to vector<16x32xf32>
    %132 = arith.mulf %129, %114 : vector<16x32xf32>
    %133 = arith.mulf %128, %130 : vector<16x32xf32>
    %134 = arith.addf %132, %133 : vector<16x32xf32>
    %135 = math.tanh %134 : vector<16x32xf32>
    %136 = arith.mulf %131, %135 : vector<16x32xf32>
    %c80_42 = arith.constant 80 : index
    %c0_43 = arith.constant 0 : index
    %137 = vector.load %arg11[%c80_42, %c0_43] : memref<128x32xf32, #tpu.memory_space<vmem>>, vector<16x32xf32>
    tpu.vector_store %arg11[%c80_42, %c0_43], %136 {strides = array<i32>} : memref<128x32xf32, #tpu.memory_space<vmem>>, vector<16x32xf32>,
    %c96 = arith.constant 96 : index
    %c0_44 = arith.constant 0 : index
    %138 = vector.load %arg10[%c96, %c0_44] : memref<128x128xf32, #tpu.memory_space<vmem>>, vector<16x128xf32>
    %cst_45 = arith.constant dense<0.000000e+00> : vector<16x128xf32>
    %139 = tpu.matmul %136, %7, %cst_45 {dimension_numbers = #tpu.dot_dimension_numbers<[1], [0], [0], [1], [0, 0, 1, 1], [], []>} : vector<16x32xf32>, vector<32x128xf32>, vector<16x128xf32> -> vector<16x128xf32>
    %140 = arith.addf %138, %139 : vector<16x128xf32>
    %141 = math.tanh %140 : vector<16x128xf32>
    %142 = arith.negf %140 : vector<16x128xf32>
    %143 = math.exp %142 : vector<16x128xf32>
    %cst_46 = arith.constant 1.000000e+00 : f32
    %144 = vector.broadcast %cst_46 : f32 to vector<16x128xf32>
    %145 = arith.addf %144, %143 : vector<16x128xf32>
    %146 = arith.divf %144, %145 : vector<16x128xf32>
    %147 = arith.select %5, %141, %146 : vector<16x128xi1>, vector<16x128xf32>
    %148 = vector.extract_strided_slice %147 {offsets = [0, 0], sizes = [16, 32], strides = [1, 1]} : vector<16x128xf32> to vector<16x32xf32>
    %149 = vector.extract_strided_slice %147 {offsets = [0, 32], sizes = [16, 32], strides = [1, 1]} : vector<16x128xf32> to vector<16x32xf32>
    %150 = vector.extract_strided_slice %147 {offsets = [0, 64], sizes = [16, 32], strides = [1, 1]} : vector<16x128xf32> to vector<16x32xf32>
    %151 = vector.extract_strided_slice %147 {offsets = [0, 96], sizes = [16, 32], strides = [1, 1]} : vector<16x128xf32> to vector<16x32xf32>
    %152 = arith.mulf %149, %134 : vector<16x32xf32>
    %153 = arith.mulf %148, %150 : vector<16x32xf32>
    %154 = arith.addf %152, %153 : vector<16x32xf32>
    %155 = math.tanh %154 : vector<16x32xf32>
    %156 = arith.mulf %151, %155 : vector<16x32xf32>
    %c96_47 = arith.constant 96 : index
    %c0_48 = arith.constant 0 : index
    %157 = vector.load %arg11[%c96_47, %c0_48] : memref<128x32xf32, #tpu.memory_space<vmem>>, vector<16x32xf32>
    tpu.vector_store %arg11[%c96_47, %c0_48], %156 {strides = array<i32>} : memref<128x32xf32, #tpu.memory_space<vmem>>, vector<16x32xf32>,
    %c112 = arith.constant 112 : index
    %c0_49 = arith.constant 0 : index
    %158 = vector.load %arg10[%c112, %c0_49] : memref<128x128xf32, #tpu.memory_space<vmem>>, vector<16x128xf32>
    %cst_50 = arith.constant dense<0.000000e+00> : vector<16x128xf32>
    %159 = tpu.matmul %156, %7, %cst_50 {dimension_numbers = #tpu.dot_dimension_numbers<[1], [0], [0], [1], [0, 0, 1, 1], [], []>} : vector<16x32xf32>, vector<32x128xf32>, vector<16x128xf32> -> vector<16x128xf32>
    %160 = arith.addf %158, %159 : vector<16x128xf32>
    %161 = math.tanh %160 : vector<16x128xf32>
    %162 = arith.negf %160 : vector<16x128xf32>
    %163 = math.exp %162 : vector<16x128xf32>
    %cst_51 = arith.constant 1.000000e+00 : f32
    %164 = vector.broadcast %cst_51 : f32 to vector<16x128xf32>
    %165 = arith.addf %164, %163 : vector<16x128xf32>
    %166 = arith.divf %164, %165 : vector<16x128xf32>
    %167 = arith.select %5, %161, %166 : vector<16x128xi1>, vector<16x128xf32>
    %168 = vector.extract_strided_slice %167 {offsets = [0, 0], sizes = [16, 32], strides = [1, 1]} : vector<16x128xf32> to vector<16x32xf32>
    %169 = vector.extract_strided_slice %167 {offsets = [0, 32], sizes = [16, 32], strides = [1, 1]} : vector<16x128xf32> to vector<16x32xf32>
    %170 = vector.extract_strided_slice %167 {offsets = [0, 64], sizes = [16, 32], strides = [1, 1]} : vector<16x128xf32> to vector<16x32xf32>
    %171 = vector.extract_strided_slice %167 {offsets = [0, 96], sizes = [16, 32], strides = [1, 1]} : vector<16x128xf32> to vector<16x32xf32>
    %172 = arith.mulf %169, %154 : vector<16x32xf32>
    %173 = arith.mulf %168, %170 : vector<16x32xf32>
    %174 = arith.addf %172, %173 : vector<16x32xf32>
    %175 = math.tanh %174 : vector<16x32xf32>
    %176 = arith.mulf %171, %175 : vector<16x32xf32>
    %c112_52 = arith.constant 112 : index
    %c0_53 = arith.constant 0 : index
    %177 = vector.load %arg11[%c112_52, %c0_53] : memref<128x32xf32, #tpu.memory_space<vmem>>, vector<16x32xf32>
    tpu.vector_store %arg11[%c112_52, %c0_53], %176 {strides = array<i32>} : memref<128x32xf32, #tpu.memory_space<vmem>>, vector<16x32xf32>,
    %c0_54 = arith.constant 0 : index
    %c0_55 = arith.constant 0 : index
    %178 = vector.load %arg6[%c0_54, %c0_55] : memref<32x128xf32, #tpu.memory_space<vmem>>, vector<32x128xf32>
    %c0_56 = arith.constant 0 : index
    %c0_57 = arith.constant 0 : index
    %179 = vector.load %arg7[%c0_56, %c0_57] : memref<32x128xf32, #tpu.memory_space<vmem>>, vector<32x128xf32>
    %c0_58 = arith.constant 0 : index
    %c0_59 = arith.constant 0 : index
    %180 = vector.load %arg8[%c0_58, %c0_59] : memref<1x128xf32, #tpu.memory_space<vmem>>, vector<1x128xf32>
    %c0_60 = arith.constant 0 : index
    %c0_61 = arith.constant 0 : index
    %181 = vector.load %arg11[%c0_60, %c0_61] : memref<128x32xf32, #tpu.memory_space<vmem>>, vector<128x32xf32>
    %cst_62 = arith.constant dense<0.000000e+00> : vector<128x128xf32>
    %182 = tpu.matmul %181, %178, %cst_62 {dimension_numbers = #tpu.dot_dimension_numbers<[1], [0], [0], [1], [0, 0, 1, 1], [], []>} : vector<128x32xf32>, vector<32x128xf32>, vector<128x128xf32> -> vector<128x128xf32>
    %183 = vector.broadcast %180 : vector<1x128xf32> to vector<128x128xf32>
    %184 = arith.addf %182, %183 : vector<128x128xf32>
    %c0_63 = arith.constant 0 : index
    %c0_64 = arith.constant 0 : index
    %185 = vector.load %arg10[%c0_63, %c0_64] : memref<128x128xf32, #tpu.memory_space<vmem>>, vector<128x128xf32>
    tpu.vector_store %arg10[%c0_63, %c0_64], %184 {strides = array<i32>} : memref<128x128xf32, #tpu.memory_space<vmem>>, vector<128x128xf32>,
    %cst_65 = arith.constant 0.000000e+00 : f32
    %186 = vector.broadcast %cst_65 : f32 to vector<16x32xf32>
    %cst_66 = arith.constant 0.000000e+00 : f32
    %187 = vector.broadcast %cst_66 : f32 to vector<16x32xf32>
    %c0_67 = arith.constant 0 : index
    %c0_68 = arith.constant 0 : index
    %188 = vector.load %arg10[%c0_67, %c0_68] : memref<128x128xf32, #tpu.memory_space<vmem>>, vector<16x128xf32>
    %cst_69 = arith.constant dense<0.000000e+00> : vector<16x128xf32>
    %189 = tpu.matmul %186, %179, %cst_69 {dimension_numbers = #tpu.dot_dimension_numbers<[1], [0], [0], [1], [0, 0, 1, 1], [], []>} : vector<16x32xf32>, vector<32x128xf32>, vector<16x128xf32> -> vector<16x128xf32>
    %190 = arith.addf %188, %189 : vector<16x128xf32>
    %191 = math.tanh %190 : vector<16x128xf32>
    %192 = arith.negf %190 : vector<16x128xf32>
    %193 = math.exp %192 : vector<16x128xf32>
    %cst_70 = arith.constant 1.000000e+00 : f32
    %194 = vector.broadcast %cst_70 : f32 to vector<16x128xf32>
    %195 = arith.addf %194, %193 : vector<16x128xf32>
    %196 = arith.divf %194, %195 : vector<16x128xf32>
    %197 = arith.select %5, %191, %196 : vector<16x128xi1>, vector<16x128xf32>
    %198 = vector.extract_strided_slice %197 {offsets = [0, 0], sizes = [16, 32], strides = [1, 1]} : vector<16x128xf32> to vector<16x32xf32>
    %199 = vector.extract_strided_slice %197 {offsets = [0, 32], sizes = [16, 32], strides = [1, 1]} : vector<16x128xf32> to vector<16x32xf32>
    %200 = vector.extract_strided_slice %197 {offsets = [0, 64], sizes = [16, 32], strides = [1, 1]} : vector<16x128xf32> to vector<16x32xf32>
    %201 = vector.extract_strided_slice %197 {offsets = [0, 96], sizes = [16, 32], strides = [1, 1]} : vector<16x128xf32> to vector<16x32xf32>
    %202 = arith.mulf %199, %187 : vector<16x32xf32>
    %203 = arith.mulf %198, %200 : vector<16x32xf32>
    %204 = arith.addf %202, %203 : vector<16x32xf32>
    %205 = math.tanh %204 : vector<16x32xf32>
    %206 = arith.mulf %201, %205 : vector<16x32xf32>
    %c16_71 = arith.constant 16 : index
    %c0_72 = arith.constant 0 : index
    %207 = vector.load %arg10[%c16_71, %c0_72] : memref<128x128xf32, #tpu.memory_space<vmem>>, vector<16x128xf32>
    %cst_73 = arith.constant dense<0.000000e+00> : vector<16x128xf32>
    %208 = tpu.matmul %206, %179, %cst_73 {dimension_numbers = #tpu.dot_dimension_numbers<[1], [0], [0], [1], [0, 0, 1, 1], [], []>} : vector<16x32xf32>, vector<32x128xf32>, vector<16x128xf32> -> vector<16x128xf32>
    %209 = arith.addf %207, %208 : vector<16x128xf32>
    %210 = math.tanh %209 : vector<16x128xf32>
    %211 = arith.negf %209 : vector<16x128xf32>
    %212 = math.exp %211 : vector<16x128xf32>
    %cst_74 = arith.constant 1.000000e+00 : f32
    %213 = vector.broadcast %cst_74 : f32 to vector<16x128xf32>
    %214 = arith.addf %213, %212 : vector<16x128xf32>
    %215 = arith.divf %213, %214 : vector<16x128xf32>
    %216 = arith.select %5, %210, %215 : vector<16x128xi1>, vector<16x128xf32>
    %217 = vector.extract_strided_slice %216 {offsets = [0, 0], sizes = [16, 32], strides = [1, 1]} : vector<16x128xf32> to vector<16x32xf32>
    %218 = vector.extract_strided_slice %216 {offsets = [0, 32], sizes = [16, 32], strides = [1, 1]} : vector<16x128xf32> to vector<16x32xf32>
    %219 = vector.extract_strided_slice %216 {offsets = [0, 64], sizes = [16, 32], strides = [1, 1]} : vector<16x128xf32> to vector<16x32xf32>
    %220 = vector.extract_strided_slice %216 {offsets = [0, 96], sizes = [16, 32], strides = [1, 1]} : vector<16x128xf32> to vector<16x32xf32>
    %221 = arith.mulf %218, %204 : vector<16x32xf32>
    %222 = arith.mulf %217, %219 : vector<16x32xf32>
    %223 = arith.addf %221, %222 : vector<16x32xf32>
    %224 = math.tanh %223 : vector<16x32xf32>
    %225 = arith.mulf %220, %224 : vector<16x32xf32>
    %c32_75 = arith.constant 32 : index
    %c0_76 = arith.constant 0 : index
    %226 = vector.load %arg10[%c32_75, %c0_76] : memref<128x128xf32, #tpu.memory_space<vmem>>, vector<16x128xf32>
    %cst_77 = arith.constant dense<0.000000e+00> : vector<16x128xf32>
    %227 = tpu.matmul %225, %179, %cst_77 {dimension_numbers = #tpu.dot_dimension_numbers<[1], [0], [0], [1], [0, 0, 1, 1], [], []>} : vector<16x32xf32>, vector<32x128xf32>, vector<16x128xf32> -> vector<16x128xf32>
    %228 = arith.addf %226, %227 : vector<16x128xf32>
    %229 = math.tanh %228 : vector<16x128xf32>
    %230 = arith.negf %228 : vector<16x128xf32>
    %231 = math.exp %230 : vector<16x128xf32>
    %cst_78 = arith.constant 1.000000e+00 : f32
    %232 = vector.broadcast %cst_78 : f32 to vector<16x128xf32>
    %233 = arith.addf %232, %231 : vector<16x128xf32>
    %234 = arith.divf %232, %233 : vector<16x128xf32>
    %235 = arith.select %5, %229, %234 : vector<16x128xi1>, vector<16x128xf32>
    %236 = vector.extract_strided_slice %235 {offsets = [0, 0], sizes = [16, 32], strides = [1, 1]} : vector<16x128xf32> to vector<16x32xf32>
    %237 = vector.extract_strided_slice %235 {offsets = [0, 32], sizes = [16, 32], strides = [1, 1]} : vector<16x128xf32> to vector<16x32xf32>
    %238 = vector.extract_strided_slice %235 {offsets = [0, 64], sizes = [16, 32], strides = [1, 1]} : vector<16x128xf32> to vector<16x32xf32>
    %239 = vector.extract_strided_slice %235 {offsets = [0, 96], sizes = [16, 32], strides = [1, 1]} : vector<16x128xf32> to vector<16x32xf32>
    %240 = arith.mulf %237, %223 : vector<16x32xf32>
    %241 = arith.mulf %236, %238 : vector<16x32xf32>
    %242 = arith.addf %240, %241 : vector<16x32xf32>
    %243 = math.tanh %242 : vector<16x32xf32>
    %244 = arith.mulf %239, %243 : vector<16x32xf32>
    %c48_79 = arith.constant 48 : index
    %c0_80 = arith.constant 0 : index
    %245 = vector.load %arg10[%c48_79, %c0_80] : memref<128x128xf32, #tpu.memory_space<vmem>>, vector<16x128xf32>
    %cst_81 = arith.constant dense<0.000000e+00> : vector<16x128xf32>
    %246 = tpu.matmul %244, %179, %cst_81 {dimension_numbers = #tpu.dot_dimension_numbers<[1], [0], [0], [1], [0, 0, 1, 1], [], []>} : vector<16x32xf32>, vector<32x128xf32>, vector<16x128xf32> -> vector<16x128xf32>
    %247 = arith.addf %245, %246 : vector<16x128xf32>
    %248 = math.tanh %247 : vector<16x128xf32>
    %249 = arith.negf %247 : vector<16x128xf32>
    %250 = math.exp %249 : vector<16x128xf32>
    %cst_82 = arith.constant 1.000000e+00 : f32
    %251 = vector.broadcast %cst_82 : f32 to vector<16x128xf32>
    %252 = arith.addf %251, %250 : vector<16x128xf32>
    %253 = arith.divf %251, %252 : vector<16x128xf32>
    %254 = arith.select %5, %248, %253 : vector<16x128xi1>, vector<16x128xf32>
    %255 = vector.extract_strided_slice %254 {offsets = [0, 0], sizes = [16, 32], strides = [1, 1]} : vector<16x128xf32> to vector<16x32xf32>
    %256 = vector.extract_strided_slice %254 {offsets = [0, 32], sizes = [16, 32], strides = [1, 1]} : vector<16x128xf32> to vector<16x32xf32>
    %257 = vector.extract_strided_slice %254 {offsets = [0, 64], sizes = [16, 32], strides = [1, 1]} : vector<16x128xf32> to vector<16x32xf32>
    %258 = vector.extract_strided_slice %254 {offsets = [0, 96], sizes = [16, 32], strides = [1, 1]} : vector<16x128xf32> to vector<16x32xf32>
    %259 = arith.mulf %256, %242 : vector<16x32xf32>
    %260 = arith.mulf %255, %257 : vector<16x32xf32>
    %261 = arith.addf %259, %260 : vector<16x32xf32>
    %262 = math.tanh %261 : vector<16x32xf32>
    %263 = arith.mulf %258, %262 : vector<16x32xf32>
    %c64_83 = arith.constant 64 : index
    %c0_84 = arith.constant 0 : index
    %264 = vector.load %arg10[%c64_83, %c0_84] : memref<128x128xf32, #tpu.memory_space<vmem>>, vector<16x128xf32>
    %cst_85 = arith.constant dense<0.000000e+00> : vector<16x128xf32>
    %265 = tpu.matmul %263, %179, %cst_85 {dimension_numbers = #tpu.dot_dimension_numbers<[1], [0], [0], [1], [0, 0, 1, 1], [], []>} : vector<16x32xf32>, vector<32x128xf32>, vector<16x128xf32> -> vector<16x128xf32>
    %266 = arith.addf %264, %265 : vector<16x128xf32>
    %267 = math.tanh %266 : vector<16x128xf32>
    %268 = arith.negf %266 : vector<16x128xf32>
    %269 = math.exp %268 : vector<16x128xf32>
    %cst_86 = arith.constant 1.000000e+00 : f32
    %270 = vector.broadcast %cst_86 : f32 to vector<16x128xf32>
    %271 = arith.addf %270, %269 : vector<16x128xf32>
    %272 = arith.divf %270, %271 : vector<16x128xf32>
    %273 = arith.select %5, %267, %272 : vector<16x128xi1>, vector<16x128xf32>
    %274 = vector.extract_strided_slice %273 {offsets = [0, 0], sizes = [16, 32], strides = [1, 1]} : vector<16x128xf32> to vector<16x32xf32>
    %275 = vector.extract_strided_slice %273 {offsets = [0, 32], sizes = [16, 32], strides = [1, 1]} : vector<16x128xf32> to vector<16x32xf32>
    %276 = vector.extract_strided_slice %273 {offsets = [0, 64], sizes = [16, 32], strides = [1, 1]} : vector<16x128xf32> to vector<16x32xf32>
    %277 = vector.extract_strided_slice %273 {offsets = [0, 96], sizes = [16, 32], strides = [1, 1]} : vector<16x128xf32> to vector<16x32xf32>
    %278 = arith.mulf %275, %261 : vector<16x32xf32>
    %279 = arith.mulf %274, %276 : vector<16x32xf32>
    %280 = arith.addf %278, %279 : vector<16x32xf32>
    %281 = math.tanh %280 : vector<16x32xf32>
    %282 = arith.mulf %277, %281 : vector<16x32xf32>
    %c80_87 = arith.constant 80 : index
    %c0_88 = arith.constant 0 : index
    %283 = vector.load %arg10[%c80_87, %c0_88] : memref<128x128xf32, #tpu.memory_space<vmem>>, vector<16x128xf32>
    %cst_89 = arith.constant dense<0.000000e+00> : vector<16x128xf32>
    %284 = tpu.matmul %282, %179, %cst_89 {dimension_numbers = #tpu.dot_dimension_numbers<[1], [0], [0], [1], [0, 0, 1, 1], [], []>} : vector<16x32xf32>, vector<32x128xf32>, vector<16x128xf32> -> vector<16x128xf32>
    %285 = arith.addf %283, %284 : vector<16x128xf32>
    %286 = math.tanh %285 : vector<16x128xf32>
    %287 = arith.negf %285 : vector<16x128xf32>
    %288 = math.exp %287 : vector<16x128xf32>
    %cst_90 = arith.constant 1.000000e+00 : f32
    %289 = vector.broadcast %cst_90 : f32 to vector<16x128xf32>
    %290 = arith.addf %289, %288 : vector<16x128xf32>
    %291 = arith.divf %289, %290 : vector<16x128xf32>
    %292 = arith.select %5, %286, %291 : vector<16x128xi1>, vector<16x128xf32>
    %293 = vector.extract_strided_slice %292 {offsets = [0, 0], sizes = [16, 32], strides = [1, 1]} : vector<16x128xf32> to vector<16x32xf32>
    %294 = vector.extract_strided_slice %292 {offsets = [0, 32], sizes = [16, 32], strides = [1, 1]} : vector<16x128xf32> to vector<16x32xf32>
    %295 = vector.extract_strided_slice %292 {offsets = [0, 64], sizes = [16, 32], strides = [1, 1]} : vector<16x128xf32> to vector<16x32xf32>
    %296 = vector.extract_strided_slice %292 {offsets = [0, 96], sizes = [16, 32], strides = [1, 1]} : vector<16x128xf32> to vector<16x32xf32>
    %297 = arith.mulf %294, %280 : vector<16x32xf32>
    %298 = arith.mulf %293, %295 : vector<16x32xf32>
    %299 = arith.addf %297, %298 : vector<16x32xf32>
    %300 = math.tanh %299 : vector<16x32xf32>
    %301 = arith.mulf %296, %300 : vector<16x32xf32>
    %c96_91 = arith.constant 96 : index
    %c0_92 = arith.constant 0 : index
    %302 = vector.load %arg10[%c96_91, %c0_92] : memref<128x128xf32, #tpu.memory_space<vmem>>, vector<16x128xf32>
    %cst_93 = arith.constant dense<0.000000e+00> : vector<16x128xf32>
    %303 = tpu.matmul %301, %179, %cst_93 {dimension_numbers = #tpu.dot_dimension_numbers<[1], [0], [0], [1], [0, 0, 1, 1], [], []>} : vector<16x32xf32>, vector<32x128xf32>, vector<16x128xf32> -> vector<16x128xf32>
    %304 = arith.addf %302, %303 : vector<16x128xf32>
    %305 = math.tanh %304 : vector<16x128xf32>
    %306 = arith.negf %304 : vector<16x128xf32>
    %307 = math.exp %306 : vector<16x128xf32>
    %cst_94 = arith.constant 1.000000e+00 : f32
    %308 = vector.broadcast %cst_94 : f32 to vector<16x128xf32>
    %309 = arith.addf %308, %307 : vector<16x128xf32>
    %310 = arith.divf %308, %309 : vector<16x128xf32>
    %311 = arith.select %5, %305, %310 : vector<16x128xi1>, vector<16x128xf32>
    %312 = vector.extract_strided_slice %311 {offsets = [0, 0], sizes = [16, 32], strides = [1, 1]} : vector<16x128xf32> to vector<16x32xf32>
    %313 = vector.extract_strided_slice %311 {offsets = [0, 32], sizes = [16, 32], strides = [1, 1]} : vector<16x128xf32> to vector<16x32xf32>
    %314 = vector.extract_strided_slice %311 {offsets = [0, 64], sizes = [16, 32], strides = [1, 1]} : vector<16x128xf32> to vector<16x32xf32>
    %315 = vector.extract_strided_slice %311 {offsets = [0, 96], sizes = [16, 32], strides = [1, 1]} : vector<16x128xf32> to vector<16x32xf32>
    %316 = arith.mulf %313, %299 : vector<16x32xf32>
    %317 = arith.mulf %312, %314 : vector<16x32xf32>
    %318 = arith.addf %316, %317 : vector<16x32xf32>
    %319 = math.tanh %318 : vector<16x32xf32>
    %320 = arith.mulf %315, %319 : vector<16x32xf32>
    %c112_95 = arith.constant 112 : index
    %c0_96 = arith.constant 0 : index
    %321 = vector.load %arg10[%c112_95, %c0_96] : memref<128x128xf32, #tpu.memory_space<vmem>>, vector<16x128xf32>
    %cst_97 = arith.constant dense<0.000000e+00> : vector<16x128xf32>
    %322 = tpu.matmul %320, %179, %cst_97 {dimension_numbers = #tpu.dot_dimension_numbers<[1], [0], [0], [1], [0, 0, 1, 1], [], []>} : vector<16x32xf32>, vector<32x128xf32>, vector<16x128xf32> -> vector<16x128xf32>
    %323 = arith.addf %321, %322 : vector<16x128xf32>
    %324 = math.tanh %323 : vector<16x128xf32>
    %325 = arith.negf %323 : vector<16x128xf32>
    %326 = math.exp %325 : vector<16x128xf32>
    %cst_98 = arith.constant 1.000000e+00 : f32
    %327 = vector.broadcast %cst_98 : f32 to vector<16x128xf32>
    %328 = arith.addf %327, %326 : vector<16x128xf32>
    %329 = arith.divf %327, %328 : vector<16x128xf32>
    %330 = arith.select %5, %324, %329 : vector<16x128xi1>, vector<16x128xf32>
    %331 = vector.extract_strided_slice %330 {offsets = [0, 0], sizes = [16, 32], strides = [1, 1]} : vector<16x128xf32> to vector<16x32xf32>
    %332 = vector.extract_strided_slice %330 {offsets = [0, 32], sizes = [16, 32], strides = [1, 1]} : vector<16x128xf32> to vector<16x32xf32>
    %333 = vector.extract_strided_slice %330 {offsets = [0, 64], sizes = [16, 32], strides = [1, 1]} : vector<16x128xf32> to vector<16x32xf32>
    %334 = vector.extract_strided_slice %330 {offsets = [0, 96], sizes = [16, 32], strides = [1, 1]} : vector<16x128xf32> to vector<16x32xf32>
    %335 = arith.mulf %332, %318 : vector<16x32xf32>
    %336 = arith.mulf %331, %333 : vector<16x32xf32>
    %337 = arith.addf %335, %336 : vector<16x32xf32>
    %338 = math.tanh %337 : vector<16x32xf32>
    %339 = arith.mulf %334, %338 : vector<16x32xf32>
    %c0_99 = arith.constant 0 : index
    %c0_100 = arith.constant 0 : index
    %c0_101 = arith.constant 0 : index
    %340 = vector.load %arg9[%c0_99, %c0_100, %c0_101] : memref<1x16x32xf32, #tpu.memory_space<vmem>>, vector<1x16x32xf32>
    %341 = vector.shape_cast %340 : vector<1x16x32xf32> to vector<16x32xf32>
    %342 = vector.shape_cast %339 : vector<16x32xf32> to vector<1x16x32xf32>
    tpu.vector_store %arg9[%c0_99, %c0_100, %c0_101], %342 {strides = array<i32>} : memref<1x16x32xf32, #tpu.memory_space<vmem>>, vector<1x16x32xf32>,
    return
  }
  func.func @transform_0(%arg0: i32, %arg1: i32) -> (i32, i32, i32, i32) {
    %c0_i32 = arith.constant 0 : i32
    %c0_i32_0 = arith.constant 0 : i32
    %c0_i32_1 = arith.constant 0 : i32
    return %arg0, %c0_i32, %arg1, %c0_i32_0 : i32, i32, i32, i32
  }
  func.func @transform_1(%arg0: i32, %arg1: i32) -> (i32, i32) {
    %c0_i32 = arith.constant 0 : i32
    %c0_i32_0 = arith.constant 0 : i32
    %c0_i32_1 = arith.constant 0 : i32
    return %c0_i32, %c0_i32_0 : i32, i32
  }
  func.func @transform_2(%arg0: i32, %arg1: i32) -> (i32, i32) {
    %c0_i32 = arith.constant 0 : i32
    %c0_i32_0 = arith.constant 0 : i32
    %c0_i32_1 = arith.constant 0 : i32
    return %c0_i32, %c0_i32_0 : i32, i32
  }
  func.func @transform_3(%arg0: i32, %arg1: i32) -> (i32, i32) {
    %c0_i32 = arith.constant 0 : i32
    %c0_i32_0 = arith.constant 0 : i32
    %c0_i32_1 = arith.constant 0 : i32
    return %c0_i32, %c0_i32_0 : i32, i32
  }
  func.func @transform_4(%arg0: i32, %arg1: i32) -> (i32, i32) {
    %c0_i32 = arith.constant 0 : i32
    %c0_i32_0 = arith.constant 0 : i32
    %c0_i32_1 = arith.constant 0 : i32
    return %c0_i32, %c0_i32_0 : i32, i32
  }
  func.func @transform_5(%arg0: i32, %arg1: i32) -> (i32, i32) {
    %c0_i32 = arith.constant 0 : i32
    %c0_i32_0 = arith.constant 0 : i32
    %c0_i32_1 = arith.constant 0 : i32
    return %c0_i32, %c0_i32_0 : i32, i32
  }
  func.func @transform_6(%arg0: i32, %arg1: i32) -> (i32, i32) {
    %c0_i32 = arith.constant 0 : i32
    %c0_i32_0 = arith.constant 0 : i32
    %c0_i32_1 = arith.constant 0 : i32
    return %c0_i32, %c0_i32_0 : i32, i32
  }
  func.func @transform_7(%arg0: i32, %arg1: i32) -> (i32, i32, i32) {
    %c0_i32 = arith.constant 0 : i32
    %c0_i32_0 = arith.constant 0 : i32
    return %arg0, %arg1, %c0_i32 : i32, i32, i32
  }
}

</mosaic_0001>

<llo_original>
// kernel: tpu_custom_call.1
$region0: #{tpu_custom_call.1}
  #allocation0 [shape = 'u32[]', space=smem, size = 0x4, offset = 0x4, fixed_abs, tag = 'smem constant byte address 0x4 - core index']
  #allocation1 [shape = 'u32[72,128]{1,0:T(1,128)}', space=vmem, size = 0x9000, scoped, tag = 'internal scratch']
  #allocation2 [shape = 'f32[128,128]{1,0:T(8,128)}', space=vmem, size = 0x10000, scoped, tag = 'scratch operand']
  #allocation3 [shape = 'f32[128,32]{1,0:T(8,128)}', space=vmem, size = 0x10000, scoped, tag = 'scratch operand']
  %s0 = inlined_call_operand.vmem [shape: f32[2,8,16,4], index: 0, kind: input, shape index: {}]
  %s1 = inlined_call_operand.vmem [shape: f32[4,128], index: 1, kind: input, shape index: {}]
  %s2 = inlined_call_operand.vmem [shape: f32[32,128], index: 2, kind: input, shape index: {}]
  %s3 = inlined_call_operand.vmem [shape: f32[1,128], index: 3, kind: input, shape index: {}]
  %s4 = inlined_call_operand.vmem [shape: f32[32,128], index: 4, kind: input, shape index: {}]
  %s5 = inlined_call_operand.vmem [shape: f32[32,128], index: 5, kind: input, shape index: {}]
  %s6 = inlined_call_operand.vmem [shape: f32[1,128], index: 6, kind: input, shape index: {}]
  %s7 = inlined_call_operand.hbm [shape: f32[2,16,32], index: 7, kind: output, shape index: {}]
  %s8 = sld [smem:[#allocation0]]
  $region61: #{tpu_custom_call.1} parent=0
    _
  %s10 = ssub.s32 1, %s8
  %s11 = scalar_select 0, %s10, %s8
  $region1: #{tpu_custom_call.1} parent=0
    #allocation4 [shape = 'u8[16384]{0}', space=vmem, size = 0x4000, scoped, tag = 'output window, operand 0']
    #allocation5 [shape = 's32[2]{0}', space=sflag, size = 0x8, scoped, tag = 'scoped memory for tpu_custom_call.1']
    %12 = vsyncpa [#allocation5], 0
    %s13 = scalar_lea.sflag [#allocation5], 1
    %14 = vsyncpa %s13, 0
    loop: start=0, step=1, limit=4
    $region2: #{tpu_custom_call.1} parent=1 // loop_pre_header
      _
    $region3: #{tpu_custom_call.1} parent=1 // loop_header
      %s16 = sphi 0, %s20
      %p17 = scmp.ge.s32.totalorder %s16, 4
      %s23 = sphi 0, %s35
      %s24 = sphi 0, %s31
      %s25 = sphi 0, %s23
      %s26 = sphi 0, %s24
      %s27 = sphi 0, %s25
      %s28 = sphi 0, %s26
      %s40 = sphi 0, %s42
      %s43 = sphi 0, %s40
      %s44 = sphi 0, %s43
      %s60 = sphi 0, %s44
      %s64 = sphi 0, %s64
      %s66 = sphi 0, %s64
      %s67 = sphi 0, %s66
      %s81 = sphi 0, %s67
      %s85 = sphi 0, %s85
      %s87 = sphi 0, %s85
      %s88 = sphi 0, %s87
      %s102 = sphi 0, %s88
      %s106 = sphi 0, %s106
      %s108 = sphi 0, %s106
      %s109 = sphi 0, %s108
      %s123 = sphi 0, %s109
      %s127 = sphi 0, %s127
      %s129 = sphi 0, %s127
      %s130 = sphi 0, %s129
      %s144 = sphi 0, %s130
      %s148 = sphi 0, %s148
      %s150 = sphi 0, %s148
      %s151 = sphi 0, %s150
      %s165 = sphi 0, %s151
      %s169 = sphi 0, %s169
      %s171 = sphi 0, %s169
      %s172 = sphi 0, %s171
      %s186 = sphi 0, %s172
      %s194 = sphi 0, %s196
      %s197 = sphi 0, %s194
      %s198 = sphi 0, %s197
      %s214 = sphi 0, %s198
    $region4: #{tpu_custom_call.1} parent=1 // loop_header_branch
      %19 = sbr.rel (%p17) target = $region8
    $region5: #{tpu_custom_call.1} parent=1 // loop_body
      %s21 = ssub.s32 %s16, 1
      %s22 = ssub.s32 %s16, 2
      %s29 = sadd.s32 1, %s24
      %p30 = scmp.ge.s32.totalorder %s29, 1
      %s31 = scalar_select %p30, 0, %s29
      %s32 = sadd.s32 1, %s23
      %s33 = scalar_select %p30, %s32, %s23
      %p34 = scmp.ge.s32.totalorder %s33, 2
      %s35 = scalar_select %p34, 0, %s33
      %s36 = ssub.s32 %s23, %s35
      %s37 = ssub.s32 %s24, %s31
      %s38 = sor.u32 %s36, %s37
      %p39 = scmp.eq.s32.totalorder %s38, 0
      %s41 = sadd.s32 %s40, 1
      %s42 = scalar_select %p39, %s40, %s41
      %p45 = pneg %p39
      %p46 = scmp.eq.s32.totalorder %s16, 1
      %p47 = por %p45, %p46
      %p48 = scmp.ne.s32.totalorder %s40, %s43
      %p49 = scmp.eq.s32.totalorder %s16, 0
      %p50 = por %p48, %p49
      %p51 = scmp.ne.s32.totalorder %s40, %s43
      %p52 = scmp.eq.s32.totalorder %s21, 1
      %p53 = por %p51, %p52
      %p54 = scmp.ne.s32.totalorder %s43, %s44
      %p55 = scmp.eq.s32.totalorder %s21, 0
      %p56 = por %p54, %p55
      %p57 = scmp.ne.s32.totalorder %s43, %s44
      %p58 = scmp.eq.s32.totalorder %s22, 1
      %p59 = por %p57, %p58
      %p61 = scmp.ne.s32.totalorder %s44, %s60
      %p62 = scmp.eq.s32.totalorder %s22, 0
      %p63 = por %p61, %p62
      %s65 = sadd.s32 %s64, 1
      %p68 = scmp.eq.s32.totalorder %s16, 1
      %p69 = scmp.ne.s32.totalorder %s64, %s66
      %p70 = scmp.eq.s32.totalorder %s16, 0
      %p71 = por %p69, %p70
      %p72 = scmp.ne.s32.totalorder %s64, %s66
      %p73 = scmp.eq.s32.totalorder %s21, 1
      %p74 = por %p72, %p73
      %p75 = scmp.ne.s32.totalorder %s66, %s67
      %p76 = scmp.eq.s32.totalorder %s21, 0
      %p77 = por %p75, %p76
      %p78 = scmp.ne.s32.totalorder %s66, %s67
      %p79 = scmp.eq.s32.totalorder %s22, 1
      %p80 = por %p78, %p79
      %p82 = scmp.ne.s32.totalorder %s67, %s81
      %p83 = scmp.eq.s32.totalorder %s22, 0
      %p84 = por %p82, %p83
      %s86 = sadd.s32 %s85, 1
      %p89 = scmp.eq.s32.totalorder %s16, 1
      %p90 = scmp.ne.s32.totalorder %s85, %s87
      %p91 = scmp.eq.s32.totalorder %s16, 0
      %p92 = por %p90, %p91
      %p93 = scmp.ne.s32.totalorder %s85, %s87
      %p94 = scmp.eq.s32.totalorder %s21, 1
      %p95 = por %p93, %p94
      %p96 = scmp.ne.s32.totalorder %s87, %s88
      %p97 = scmp.eq.s32.totalorder %s21, 0
      %p98 = por %p96, %p97
      %p99 = scmp.ne.s32.totalorder %s87, %s88
      %p100 = scmp.eq.s32.totalorder %s22, 1
      %p101 = por %p99, %p100
      %p103 = scmp.ne.s32.totalorder %s88, %s102
      %p104 = scmp.eq.s32.totalorder %s22, 0
      %p105 = por %p103, %p104
      %s107 = sadd.s32 %s106, 1
      %p110 = scmp.eq.s32.totalorder %s16, 1
      %p111 = scmp.ne.s32.totalorder %s106, %s108
      %p112 = scmp.eq.s32.totalorder %s16, 0
      %p113 = por %p111, %p112
      %p114 = scmp.ne.s32.totalorder %s106, %s108
      %p115 = scmp.eq.s32.totalorder %s21, 1
      %p116 = por %p114, %p115
      %p117 = scmp.ne.s32.totalorder %s108, %s109
      %p118 = scmp.eq.s32.totalorder %s21, 0
      %p119 = por %p117, %p118
      %p120 = scmp.ne.s32.totalorder %s108, %s109
      %p121 = scmp.eq.s32.totalorder %s22, 1
      %p122 = por %p120, %p121
      %p124 = scmp.ne.s32.totalorder %s109, %s123
      %p125 = scmp.eq.s32.totalorder %s22, 0
      %p126 = por %p124, %p125
      %s128 = sadd.s32 %s127, 1
      %p131 = scmp.eq.s32.totalorder %s16, 1
      %p132 = scmp.ne.s32.totalorder %s127, %s129
      %p133 = scmp.eq.s32.totalorder %s16, 0
      %p134 = por %p132, %p133
      %p135 = scmp.ne.s32.totalorder %s127, %s129
      %p136 = scmp.eq.s32.totalorder %s21, 1
      %p137 = por %p135, %p136
      %p138 = scmp.ne.s32.totalorder %s129, %s130
      %p139 = scmp.eq.s32.totalorder %s21, 0
      %p140 = por %p138, %p139
      %p141 = scmp.ne.s32.totalorder %s129, %s130
      %p142 = scmp.eq.s32.totalorder %s22, 1
      %p143 = por %p141, %p142
      %p145 = scmp.ne.s32.totalorder %s130, %s144
      %p146 = scmp.eq.s32.totalorder %s22, 0
      %p147 = por %p145, %p146
      %s149 = sadd.s32 %s148, 1
      %p152 = scmp.eq.s32.totalorder %s16, 1
      %p153 = scmp.ne.s32.totalorder %s148, %s150
      %p154 = scmp.eq.s32.totalorder %s16, 0
      %p155 = por %p153, %p154
      %p156 = scmp.ne.s32.totalorder %s148, %s150
      %p157 = scmp.eq.s32.totalorder %s21, 1
      %p158 = por %p156, %p157
      %p159 = scmp.ne.s32.totalorder %s150, %s151
      %p160 = scmp.eq.s32.totalorder %s21, 0
      %p161 = por %p159, %p160
      %p162 = scmp.ne.s32.totalorder %s150, %s151
      %p163 = scmp.eq.s32.totalorder %s22, 1
      %p164 = por %p162, %p163
      %p166 = scmp.ne.s32.totalorder %s151, %s165
      %p167 = scmp.eq.s32.totalorder %s22, 0
      %p168 = por %p166, %p167
      %s170 = sadd.s32 %s169, 1
      %p173 = scmp.eq.s32.totalorder %s16, 1
      %p174 = scmp.ne.s32.totalorder %s169, %s171
      %p175 = scmp.eq.s32.totalorder %s16, 0
      %p176 = por %p174, %p175
      %p177 = scmp.ne.s32.totalorder %s169, %s171
      %p178 = scmp.eq.s32.totalorder %s21, 1
      %p179 = por %p177, %p178
      %p180 = scmp.ne.s32.totalorder %s171, %s172
      %p181 = scmp.eq.s32.totalorder %s21, 0
      %p182 = por %p180, %p181
      %p183 = scmp.ne.s32.totalorder %s171, %s172
      %p184 = scmp.eq.s32.totalorder %s22, 1
      %p185 = por %p183, %p184
      %p187 = scmp.ne.s32.totalorder %s172, %s186
      %p188 = scmp.eq.s32.totalorder %s22, 0
      %p189 = por %p187, %p188
      %s190 = ssub.s32 %s23, %s35
      %s191 = ssub.s32 %s24, %s31
      %s192 = sor.u32 %s190, %s191
      %p193 = scmp.eq.s32.totalorder %s192, 0
      %s195 = sadd.s32 %s194, 1
      %s196 = scalar_select %p193, %s194, %s195
      %p199 = pneg %p193
      %p200 = scmp.eq.s32.totalorder %s16, 1
      %p201 = por %p199, %p200
      %p202 = scmp.ne.s32.totalorder %s194, %s197
      %p203 = scmp.eq.s32.totalorder %s16, 0
      %p204 = por %p202, %p203
      %p205 = scmp.ne.s32.totalorder %s194, %s197
      %p206 = scmp.eq.s32.totalorder %s21, 1
      %p207 = por %p205, %p206
      %p208 = scmp.ne.s32.totalorder %s197, %s198
      %p209 = scmp.eq.s32.totalorder %s21, 0
      %p210 = por %p208, %p209
      %p211 = scmp.ne.s32.totalorder %s197, %s198
      %p212 = scmp.eq.s32.totalorder %s22, 1
      %p213 = por %p211, %p212
      %p215 = scmp.ne.s32.totalorder %s198, %s214
      %p216 = scmp.eq.s32.totalorder %s22, 0
      %p217 = por %p215, %p216
      %p218 = scmp.le.s32.totalorder 1, %s16
      %p219 = scmp.lt.s32.totalorder %s16, 3
      %p220 = pnand %p218, %p219
      %p221 = pneg %p220
      // Predicated region
      $region9: #{tpu_custom_call.1} parent=5 // pred_check
        _
      $region10: #{tpu_custom_call.1} parent=5 // pred_check_branch
        %223 = sbr.rel (%p220) target = $region12
      $region11: #{tpu_custom_call.1} parent=5 // pred_region
        %s224 = ssub.s32 %s16, 1
        // Predicated region
        $region13: #{tpu_custom_call.1} parent=11 // pred_check
          %p225 = pneg %p77
        $region14: #{tpu_custom_call.1} parent=11 // pred_check_branch
          %227 = sbr.rel (%p225) target = $region16
        $region15: #{tpu_custom_call.1} parent=11 // pred_region
          _
        $region16: #{tpu_custom_call.1} parent=11 // pred_fallthru
          _
        // Predicated region
        $region17: #{tpu_custom_call.1} parent=11 // pred_check
          %p228 = pneg %p98
        $region18: #{tpu_custom_call.1} parent=11 // pred_check_branch
          %230 = sbr.rel (%p228) target = $region20
        $region19: #{tpu_custom_call.1} parent=11 // pred_region
          _
        $region20: #{tpu_custom_call.1} parent=11 // pred_fallthru
          _
        // Predicated region
        $region21: #{tpu_custom_call.1} parent=11 // pred_check
          %p231 = pneg %p119
        $region22: #{tpu_custom_call.1} parent=11 // pred_check_branch
          %233 = sbr.rel (%p231) target = $region24
        $region23: #{tpu_custom_call.1} parent=11 // pred_region
          _
        $region24: #{tpu_custom_call.1} parent=11 // pred_fallthru
          _
        // Predicated region
        $region25: #{tpu_custom_call.1} parent=11 // pred_check
          %p234 = pneg %p140
        $region26: #{tpu_custom_call.1} parent=11 // pred_check_branch
          %236 = sbr.rel (%p234) target = $region28
        $region27: #{tpu_custom_call.1} parent=11 // pred_region
          _
        $region28: #{tpu_custom_call.1} parent=11 // pred_fallthru
          _
        // Predicated region
        $region29: #{tpu_custom_call.1} parent=11 // pred_check
          %p237 = pneg %p161
        $region30: #{tpu_custom_call.1} parent=11 // pred_check_branch
          %239 = sbr.rel (%p237) target = $region32
        $region31: #{tpu_custom_call.1} parent=11 // pred_region
          _
        $region32: #{tpu_custom_call.1} parent=11 // pred_fallthru
          _
        // Predicated region
        $region33: #{tpu_custom_call.1} parent=11 // pred_check
          %p240 = pneg %p182
        $region34: #{tpu_custom_call.1} parent=11 // pred_check_branch
          %242 = sbr.rel (%p240) target = $region36
        $region35: #{tpu_custom_call.1} parent=11 // pred_region
          _
        $region36: #{tpu_custom_call.1} parent=11 // pred_fallthru
          _
      $region12: #{tpu_custom_call.1} parent=5 // pred_fallthru
        _
      %p243 = scmp.lt.s32.totalorder %s16, 2
      // Predicated region
      $region37: #{tpu_custom_call.1} parent=5 // pred_check
        %p244 = pneg %p243
      $region38: #{tpu_custom_call.1} parent=5 // pred_check_branch
        %246 = sbr.rel (%p244) target = $region40
      $region39: #{tpu_custom_call.1} parent=5 // pred_region
        // Predicated region
        $region41: #{tpu_custom_call.1} parent=39 // pred_check
          %p247 = pneg %p50
        $region42: #{tpu_custom_call.1} parent=39 // pred_check_branch
          %249 = sbr.rel (%p247) target = $region44
        $region43: #{tpu_custom_call.1} parent=39 // pred_region
          %s250 = smul.u32 2, %s24
          %p251 = scmp.lt.s32.totalorder %s23, 1
          %s252 = scalar_select %p251, %s23, 1
          %p253 = scmp.lt.s32.totalorder %s250, 1
          %s254 = scalar_select %p253, %s250, 1
          %s255 = smul.addr %s252, 16
          %s256 = sadd.s32 %s254, %s255
          %s257 = smul.addr %s256, 8
          %s258 = scalar_lea.vmem %s0, %s257
          %s259 = smul.u32 2, %s24
        $region44: #{tpu_custom_call.1} parent=39 // pred_fallthru
          _
      $region40: #{tpu_custom_call.1} parent=5 // pred_fallthru
        _
      %p260 = scmp.le.s32.totalorder 1, %s16
      %p261 = scmp.lt.s32.totalorder %s16, 3
      %p262 = pnand %p260, %p261
      %p263 = pneg %p262
      // Predicated region
      $region45: #{tpu_custom_call.1} parent=5 // pred_check
        _
      $region46: #{tpu_custom_call.1} parent=5 // pred_check_branch
        %265 = sbr.rel (%p262) target = $region48
      $region47: #{tpu_custom_call.1} parent=5 // pred_region
        %s266 = ssub.s32 %s16, 1
        %s267 = smul.u32 2, %s26
        %p268 = scmp.lt.s32.totalorder %s25, 1
        %s269 = scalar_select %p268, %s25, 1
        %p270 = scmp.lt.s32.totalorder %s267, 1
        %s271 = scalar_select %p270, %s267, 1
        %s272 = smul.addr %s269, 16
        %s273 = sadd.s32 %s271, %s272
        %s274 = smul.addr %s273, 8
        %s275 = scalar_lea.vmem %s0, %s274
        %p276 = pneg %p56
        %p277 = pneg %p53
        %p278 = pneg %p77
        %p279 = pneg %p74
        %p280 = pneg %p98
        %p281 = pneg %p95
        %p282 = pneg %p119
        %p283 = pneg %p116
        %p284 = pneg %p140
        %p285 = pneg %p137
        %p286 = pneg %p161
        %p287 = pneg %p158
        %p288 = pneg %p182
        %p289 = pneg %p179
        %p290 = pneg %p210
        %p291 = pneg %p207
        %s292 = sand.u32 %s197, 1
        %s293 = scalar_lea.sflag [#allocation5], %s292
        %s294 = sand.u32 %s197, 1
        %s295 = smul.addr %s294, 16
        %s296 = scalar_lea.vmem [#allocation4], %s295
        %s297 = smul.u32 2, %s26
        %p298 = scmp.lt.s32.totalorder %s25, 1
        %s299 = scalar_select %p298, %s25, 1
        %p300 = scmp.lt.s32.totalorder %s297, 1
        %s301 = scalar_select %p300, %s297, 1
        %s302 = smul.addr %s299, 16
        %s303 = sadd.s32 %s301, %s302
        %s304 = smul.addr %s303, 8
        %s305 = scalar_lea.vmem %s0, %s304
        %s306 = smul.u32 2, %s26
        %s307 = smul.u32 2, %s26
        %v308 = vlaneseq
        %v309 = vand.u32 %v308, 127
        %vm310 = vcmp.ge.s32.totalorder %v309, 64
        %vm311 = vcmp.lt.s32.totalorder %v309, 96
        %vm312 = vmand %vm310, %vm311
        %v313 = vld [vmem:[%s1] sm:$0xf]
        %v314 = vld [vmem:[%s2] sm:$0xff]
        %v315 = vld [vmem:[%s2 + $0x8] sm:$0xff]
        %v316 = vld [vmem:[%s2 + $0x10] sm:$0xff]
        %v317 = vld [vmem:[%s2 + $0x18] sm:$0xff]
        %v318 = vld [vmem:[%s3] sm:$0x1]
        %v319 = vld [vmem:[%s305] sm:$0xff]
        %v320 = vld [vmem:[%s305 + $0x8] sm:$0xff]
        %v321 = vld [vmem:[%s305 + $0x10] sm:$0xff]
        %v322 = vld [vmem:[%s305 + $0x18] sm:$0xff]
        %v323 = vld [vmem:[%s305 + $0x20] sm:$0xff]
        %v324 = vld [vmem:[%s305 + $0x28] sm:$0xff]
        %v325 = vld [vmem:[%s305 + $0x30] sm:$0xff]
        %v326 = vld [vmem:[%s305 + $0x38] sm:$0xff]
        %v327 = vld [vmem:[%s305 + $0x40] sm:$0xff]
        %v328 = vld [vmem:[%s305 + $0x48] sm:$0xff]
        %v329 = vld [vmem:[%s305 + $0x50] sm:$0xff]
        %v330 = vld [vmem:[%s305 + $0x58] sm:$0xff]
        %v331 = vld [vmem:[%s305 + $0x60] sm:$0xff]
        %v332 = vld [vmem:[%s305 + $0x68] sm:$0xff]
        %v333 = vld [vmem:[%s305 + $0x70] sm:$0xff]
        %v334 = vld [vmem:[%s305 + $0x78] sm:$0xff]
        %v336 = vperm.slane %v318, 0
        %vm338 = vcmask 31744
        %v340 = vsel %vm338, %v319, 0
        %v343 = vsel %vm338, %v320, 0
        %v346 = vsel %vm338, %v321, 0
        %v349 = vsel %vm338, %v322, 0
        %v352 = vsel %vm338, %v323, 0
        %v355 = vsel %vm338, %v324, 0
        %v358 = vsel %vm338, %v325, 0
        %v361 = vsel %vm338, %v326, 0
        %v364 = vsel %vm338, %v327, 0
        %v367 = vsel %vm338, %v328, 0
        %v370 = vsel %vm338, %v329, 0
        %v373 = vsel %vm338, %v330, 0
        %v376 = vsel %vm338, %v331, 0
        %v379 = vsel %vm338, %v332, 0
        %v382 = vsel %vm338, %v333, 0
        %v385 = vsel %vm338, %v334, 0
        %vm387 = vcmask 1043456
        %v389 = vsel %vm387, %v313, 0
        %391 = vmatpush.msra.mxu0 0.0
        %392 = vmatpush.msra.mxu0 0.0
        %393 = vmatpush.msra.mxu0 0.0
        %394 = vmatpush.msra.mxu0 0.0
        %395 = vmatpush.msra.mxu0 0.0
        %396 = vmatpush.msra.mxu0 0.0
        %397 = vmatpush.msra.mxu0 0.0
        %398 = vmatpush.msra.mxu0 0.0
        %399 = vmatpush.msra.mxu0 0.0
        %400 = vmatpush.msra.mxu0 0.0
        %401 = vmatpush.msra.mxu0 0.0
        %402 = vmatpush.msra.mxu0 0.0
        %403 = vmatpush.msra.mxu0 0.0
        %404 = vmatpush.msra.mxu0 0.0
        %405 = vmatpush.msra.mxu0 0.0
        %406 = vmatpush.msra.mxu0 %v389
        %407 = vmatmul.f32.gmra.mxu0 %v340
        %v408 = vpop.f32.mrf.mxu0
        %v409 = vadd.f32 %v336, %v408
        %410 = vmatmul.f32.gmra.mxu0 %v343
        %v411 = vpop.f32.mrf.mxu0
        %v412 = vadd.f32 %v336, %v411
        %413 = vmatmul.f32.gmra.mxu0 %v346
        %v414 = vpop.f32.mrf.mxu0
        %v415 = vadd.f32 %v336, %v414
        %416 = vmatmul.f32.gmra.mxu0 %v349
        %v417 = vpop.f32.mrf.mxu0
        %v418 = vadd.f32 %v336, %v417
        %419 = vmatmul.f32.gmra.mxu0 %v352
        %v420 = vpop.f32.mrf.mxu0
        %v421 = vadd.f32 %v336, %v420
        %422 = vmatmul.f32.gmra.mxu0 %v355
        %v423 = vpop.f32.mrf.mxu0
        %v424 = vadd.f32 %v336, %v423
        %425 = vmatmul.f32.gmra.mxu0 %v358
        %v426 = vpop.f32.mrf.mxu0
        %v427 = vadd.f32 %v336, %v426
        %428 = vmatmul.f32.gmra.mxu0 %v361
        %v429 = vpop.f32.mrf.mxu0
        %v430 = vadd.f32 %v336, %v429
        %431 = vmatmul.f32.gmra.mxu0 %v364
        %v432 = vpop.f32.mrf.mxu0
        %v433 = vadd.f32 %v336, %v432
        %434 = vmatmul.f32.gmra.mxu0 %v367
        %v435 = vpop.f32.mrf.mxu0
        %v436 = vadd.f32 %v336, %v435
        %437 = vmatmul.f32.gmra.mxu0 %v370
        %v438 = vpop.f32.mrf.mxu0
        %v439 = vadd.f32 %v336, %v438
        %440 = vmatmul.f32.gmra.mxu0 %v373
        %v441 = vpop.f32.mrf.mxu0
        %v442 = vadd.f32 %v336, %v441
        %443 = vmatmul.f32.gmra.mxu0 %v376
        %v444 = vpop.f32.mrf.mxu0
        %v445 = vadd.f32 %v336, %v444
        %446 = vmatmul.f32.gmra.mxu0 %v379
        %v447 = vpop.f32.mrf.mxu0
        %v448 = vadd.f32 %v336, %v447
        %449 = vmatmul.f32.gmra.mxu0 %v382
        %v450 = vpop.f32.mrf.mxu0
        %v451 = vadd.f32 %v336, %v450
        %452 = vmatmul.f32.gmra.mxu0 %v385
        %v453 = vpop.f32.mrf.mxu0
        %v454 = vadd.f32 %v336, %v453
        %455 = vdwg.mxu0
        %456 = vst [vmem:[#allocation2] sm:$0xff] %v409
        %457 = vst [vmem:[#allocation2 + $0x8] sm:$0xff] %v412
        %458 = vst [vmem:[#allocation2 + $0x10] sm:$0xff] %v415
        %459 = vst [vmem:[#allocation2 + $0x18] sm:$0xff] %v418
        %460 = vst [vmem:[#allocation2 + $0x20] sm:$0xff] %v421
        %461 = vst [vmem:[#allocation2 + $0x28] sm:$0xff] %v424
        %462 = vst [vmem:[#allocation2 + $0x30] sm:$0xff] %v427
        %463 = vst [vmem:[#allocation2 + $0x38] sm:$0xff] %v430
        %464 = vst [vmem:[#allocation2 + $0x40] sm:$0xff] %v433
        %465 = vst [vmem:[#allocation2 + $0x48] sm:$0xff] %v436
        %466 = vst [vmem:[#allocation2 + $0x50] sm:$0xff] %v439
        %467 = vst [vmem:[#allocation2 + $0x58] sm:$0xff] %v442
        %468 = vst [vmem:[#allocation2 + $0x60] sm:$0xff] %v445
        %469 = vst [vmem:[#allocation2 + $0x68] sm:$0xff] %v448
        %470 = vst [vmem:[#allocation2 + $0x70] sm:$0xff] %v451
        %471 = vst [vmem:[#allocation2 + $0x78] sm:$0xff] %v454
        %v472 = vld [vmem:[#allocation2] sm:$0xff]
        %v473 = vld [vmem:[#allocation2 + $0x8] sm:$0xff]
        %vm474 = vcmask 261120
        %v476 = vsel %vm474, 0.0, 0
        %478 = vmatpush.msra.mxu0 0.0
        %479 = vmatpush.msra.mxu0 0.0
        %480 = vmatpush.msra.mxu0 0.0
        %481 = vmatpush.msra.mxu0 0.0
        %482 = vmatpush.msra.mxu0 0.0
        %483 = vmatpush.msra.mxu0 0.0
        %484 = vmatpush.msra.mxu0 0.0
        %485 = vmatpush.msra.mxu0 0.0
        %486 = vmatpush.msra.mxu0 0.0
        %487 = vmatpush.msra.mxu0 0.0
        %488 = vmatpush.msra.mxu0 0.0
        %489 = vmatpush.msra.mxu0 0.0
        %490 = vmatpush.msra.mxu0 %v317
        %491 = vmatpush.msra.mxu0 %v316
        %492 = vmatpush.msra.mxu0 %v315
        %493 = vmatpush.msra.mxu0 %v314
        %494 = vmatmul.f32.gmra.mxu0 %v476
        %v495 = vpop.f32.mrf.mxu0
        %v496 = vadd.f32 0.0, %v495
        %497 = vmatmul.f32.gmra.mxu0 %v476
        %v498 = vpop.f32.mrf.mxu0
        %v499 = vadd.f32 0.0, %v498
        %500 = vdwg.mxu0
        %v501 = vadd.f32 %v472, %v496
        %v502 = vadd.f32 %v473, %v499
        %v503 = vtanh.pop %v501
        %v504 = vtanh.pop %v502
        %v505 = vxor.u32 %v501, 2147483648
        %v506 = vxor.u32 %v502, 2147483648
        %v507 = vmul.f32 %v505, 1.442695
        %v508 = vpow.pop %v507
        %v509 = vmul.f32 %v506, 1.442695
        %v510 = vpow.pop %v509
        %v511 = vadd.f32 %v508, 1.0
        %v512 = vadd.f32 %v510, 1.0
        %v513 = vrcp.pop %v511
        %v514 = vmul.f32 %v511, %v513
        %v515 = vsub.f32 1.0, %v514
        %v516 = vmul.f32 %v513, %v515
        %v517 = vadd.f32 %v513, %v516
        %vm518 = vweird.f32 %v511
        %vm519 = vweird.f32 %v513
        %vm520 = vmor %vm518, %vm519
        %v521 = vsel %vm520, %v513, %v517
        %v522 = vand.u32 2147483647, %v511
        %vm523 = vcmp.eq.f32.partialorder %v522, 8.507059e+37
        %v524 = vand.u32 %v511, 2147483648
        %v525 = vor.u32 1.1754944e-38, %v524
        %v526 = vsel %vm523, %v525, %v521
        %v527 = vmul.f32 1.0, %v526
        %v528 = vrcp.pop %v512
        %v529 = vmul.f32 %v512, %v528
        %v530 = vsub.f32 1.0, %v529
        %v531 = vmul.f32 %v528, %v530
        %v532 = vadd.f32 %v528, %v531
        %vm533 = vweird.f32 %v512
        %vm534 = vweird.f32 %v528
        %vm535 = vmor %vm533, %vm534
        %v536 = vsel %vm535, %v528, %v532
        %v537 = vand.u32 2147483647, %v512
        %vm538 = vcmp.eq.f32.partialorder %v537, 8.507059e+37
        %v539 = vand.u32 %v512, 2147483648
        %v540 = vor.u32 1.1754944e-38, %v539
        %v541 = vsel %vm538, %v540, %v536
        %v542 = vmul.f32 1.0, %v541
        %v543 = vsel %vm312, %v503, %v527
        %v544 = vsel %vm312, %v504, %v542
        %v545 = vmul.f32 %v543, 0.0
        %v546 = vmul.f32 %v544, 0.0
        %549 = vrot.lane.b32.xlu0 %v543, 64
        %v550 = vpop.permute.xlu0 %549
        %551 = vrot.lane.b32.xlu0 %v544, 64
        %v552 = vpop.permute.xlu0 %551
        %v555 = vmul.f32 %v543, %v550
        %v556 = vmul.f32 %v544, %v552
        %559 = vrot.lane.b32.xlu0 %v555, 32
        %v560 = vpop.permute.xlu0 %559
        %561 = vrot.lane.b32.xlu0 %v556, 32
        %v562 = vpop.permute.xlu0 %561
        %v565 = vadd.f32 %v545, %v560
        %v566 = vadd.f32 %v546, %v562
        %v567 = vtanh.pop %v565
        %v568 = vtanh.pop %v566
        %571 = vrot.lane.b32.xlu0 %v567, 64
        %v572 = vpop.permute.xlu0 %571
        %573 = vrot.lane.b32.xlu0 %v568, 64
        %v574 = vpop.permute.xlu0 %573
        %v577 = vmul.f32 %v543, %v572
        %v578 = vmul.f32 %v544, %v574
        %581 = vrot.lane.b32.xlu0 %v577, 32
        %v582 = vpop.permute.xlu0 %581
        %583 = vrot.lane.b32.xlu0 %v578, 32
        %v584 = vpop.permute.xlu0 %583
        %587 = vst.msk [vmem:[#allocation3] sm:$0xff] %vm474, %v582
        %588 = vst.msk [vmem:[#allocation3 + $0x8] sm:$0xff] %vm474, %v584
        %v589 = vld [vmem:[#allocation2 + $0x10] sm:$0xff]
        %v590 = vld [vmem:[#allocation2 + $0x18] sm:$0xff]
        %v591 = vsel %vm474, %v582, 0
        %v593 = vsel %vm474, %v584, 0
        %595 = vmatpush.msra.mxu0 0.0
        %596 = vmatpush.msra.mxu0 0.0
        %597 = vmatpush.msra.mxu0 0.0
        %598 = vmatpush.msra.mxu0 0.0
        %599 = vmatpush.msra.mxu0 0.0
        %600 = vmatpush.msra.mxu0 0.0
        %601 = vmatpush.msra.mxu0 0.0
        %602 = vmatpush.msra.mxu0 0.0
        %603 = vmatpush.msra.mxu0 0.0
        %604 = vmatpush.msra.mxu0 0.0
        %605 = vmatpush.msra.mxu0 0.0
        %606 = vmatpush.msra.mxu0 0.0
        %607 = vmatpush.msra.mxu0 %v317
        %608 = vmatpush.msra.mxu0 %v316
        %609 = vmatpush.msra.mxu0 %v315
        %610 = vmatpush.msra.mxu0 %v314
        %611 = vmatmul.f32.gmra.mxu0 %v591
        %v612 = vpop.f32.mrf.mxu0
        %v613 = vadd.f32 0.0, %v612
        %614 = vmatmul.f32.gmra.mxu0 %v593
        %v615 = vpop.f32.mrf.mxu0
        %v616 = vadd.f32 0.0, %v615
        %617 = vdwg.mxu0
        %v618 = vadd.f32 %v589, %v613
        %v619 = vadd.f32 %v590, %v616
        %v620 = vtanh.pop %v618
        %v621 = vtanh.pop %v619
        %v622 = vxor.u32 %v618, 2147483648
        %v623 = vxor.u32 %v619, 2147483648
        %v624 = vmul.f32 %v622, 1.442695
        %v625 = vpow.pop %v624
        %v626 = vmul.f32 %v623, 1.442695
        %v627 = vpow.pop %v626
        %v628 = vadd.f32 %v625, 1.0
        %v629 = vadd.f32 %v627, 1.0
        %v630 = vrcp.pop %v628
        %v631 = vmul.f32 %v628, %v630
        %v632 = vsub.f32 1.0, %v631
        %v633 = vmul.f32 %v630, %v632
        %v634 = vadd.f32 %v630, %v633
        %vm635 = vweird.f32 %v628
        %vm636 = vweird.f32 %v630
        %vm637 = vmor %vm635, %vm636
        %v638 = vsel %vm637, %v630, %v634
        %v639 = vand.u32 2147483647, %v628
        %vm640 = vcmp.eq.f32.partialorder %v639, 8.507059e+37
        %v641 = vand.u32 %v628, 2147483648
        %v642 = vor.u32 1.1754944e-38, %v641
        %v643 = vsel %vm640, %v642, %v638
        %v644 = vmul.f32 1.0, %v643
        %v645 = vrcp.pop %v629
        %v646 = vmul.f32 %v629, %v645
        %v647 = vsub.f32 1.0, %v646
        %v648 = vmul.f32 %v645, %v647
        %v649 = vadd.f32 %v645, %v648
        %vm650 = vweird.f32 %v629
        %vm651 = vweird.f32 %v645
        %vm652 = vmor %vm650, %vm651
        %v653 = vsel %vm652, %v645, %v649
        %v654 = vand.u32 2147483647, %v629
        %vm655 = vcmp.eq.f32.partialorder %v654, 8.507059e+37
        %v656 = vand.u32 %v629, 2147483648
        %v657 = vor.u32 1.1754944e-38, %v656
        %v658 = vsel %vm655, %v657, %v653
        %v659 = vmul.f32 1.0, %v658
        %v660 = vsel %vm312, %v620, %v644
        %v661 = vsel %vm312, %v621, %v659
        %v662 = vmul.f32 %v660, %v565
        %v663 = vmul.f32 %v661, %v566
        %666 = vrot.lane.b32.xlu0 %v660, 64
        %v667 = vpop.permute.xlu0 %666
        %668 = vrot.lane.b32.xlu0 %v661, 64
        %v669 = vpop.permute.xlu0 %668
        %v672 = vmul.f32 %v660, %v667
        %v673 = vmul.f32 %v661, %v669
        %676 = vrot.lane.b32.xlu0 %v672, 32
        %v677 = vpop.permute.xlu0 %676
        %678 = vrot.lane.b32.xlu0 %v673, 32
        %v679 = vpop.permute.xlu0 %678
        %v682 = vadd.f32 %v662, %v677
        %v683 = vadd.f32 %v663, %v679
        %v684 = vtanh.pop %v682
        %v685 = vtanh.pop %v683
        %688 = vrot.lane.b32.xlu0 %v684, 64
        %v689 = vpop.permute.xlu0 %688
        %690 = vrot.lane.b32.xlu0 %v685, 64
        %v691 = vpop.permute.xlu0 %690
        %v694 = vmul.f32 %v660, %v689
        %v695 = vmul.f32 %v661, %v691
        %698 = vrot.lane.b32.xlu0 %v694, 32
        %v699 = vpop.permute.xlu0 %698
        %700 = vrot.lane.b32.xlu0 %v695, 32
        %v701 = vpop.permute.xlu0 %700
        %704 = vst.msk [vmem:[#allocation3 + $0x10] sm:$0xff] %vm474, %v699
        %705 = vst.msk [vmem:[#allocation3 + $0x18] sm:$0xff] %vm474, %v701
        %v706 = vld [vmem:[#allocation2 + $0x20] sm:$0xff]
        %v707 = vld [vmem:[#allocation2 + $0x28] sm:$0xff]
        %v708 = vsel %vm474, %v699, 0
        %v710 = vsel %vm474, %v701, 0
        %712 = vmatpush.msra.mxu0 0.0
        %713 = vmatpush.msra.mxu0 0.0
        %714 = vmatpush.msra.mxu0 0.0
        %715 = vmatpush.msra.mxu0 0.0
        %716 = vmatpush.msra.mxu0 0.0
        %717 = vmatpush.msra.mxu0 0.0
        %718 = vmatpush.msra.mxu0 0.0
        %719 = vmatpush.msra.mxu0 0.0
        %720 = vmatpush.msra.mxu0 0.0
        %721 = vmatpush.msra.mxu0 0.0
        %722 = vmatpush.msra.mxu0 0.0
        %723 = vmatpush.msra.mxu0 0.0
        %724 = vmatpush.msra.mxu0 %v317
        %725 = vmatpush.msra.mxu0 %v316
        %726 = vmatpush.msra.mxu0 %v315
        %727 = vmatpush.msra.mxu0 %v314
        %728 = vmatmul.f32.gmra.mxu0 %v708
        %v729 = vpop.f32.mrf.mxu0
        %v730 = vadd.f32 0.0, %v729
        %731 = vmatmul.f32.gmra.mxu0 %v710
        %v732 = vpop.f32.mrf.mxu0
        %v733 = vadd.f32 0.0, %v732
        %734 = vdwg.mxu0
        %v735 = vadd.f32 %v706, %v730
        %v736 = vadd.f32 %v707, %v733
        %v737 = vtanh.pop %v735
        %v738 = vtanh.pop %v736
        %v739 = vxor.u32 %v735, 2147483648
        %v740 = vxor.u32 %v736, 2147483648
        %v741 = vmul.f32 %v739, 1.442695
        %v742 = vpow.pop %v741
        %v743 = vmul.f32 %v740, 1.442695
        %v744 = vpow.pop %v743
        %v745 = vadd.f32 %v742, 1.0
        %v746 = vadd.f32 %v744, 1.0
        %v747 = vrcp.pop %v745
        %v748 = vmul.f32 %v745, %v747
        %v749 = vsub.f32 1.0, %v748
        %v750 = vmul.f32 %v747, %v749
        %v751 = vadd.f32 %v747, %v750
        %vm752 = vweird.f32 %v745
        %vm753 = vweird.f32 %v747
        %vm754 = vmor %vm752, %vm753
        %v755 = vsel %vm754, %v747, %v751
        %v756 = vand.u32 2147483647, %v745
        %vm757 = vcmp.eq.f32.partialorder %v756, 8.507059e+37
        %v758 = vand.u32 %v745, 2147483648
        %v759 = vor.u32 1.1754944e-38, %v758
        %v760 = vsel %vm757, %v759, %v755
        %v761 = vmul.f32 1.0, %v760
        %v762 = vrcp.pop %v746
        %v763 = vmul.f32 %v746, %v762
        %v764 = vsub.f32 1.0, %v763
        %v765 = vmul.f32 %v762, %v764
        %v766 = vadd.f32 %v762, %v765
        %vm767 = vweird.f32 %v746
        %vm768 = vweird.f32 %v762
        %vm769 = vmor %vm767, %vm768
        %v770 = vsel %vm769, %v762, %v766
        %v771 = vand.u32 2147483647, %v746
        %vm772 = vcmp.eq.f32.partialorder %v771, 8.507059e+37
        %v773 = vand.u32 %v746, 2147483648
        %v774 = vor.u32 1.1754944e-38, %v773
        %v775 = vsel %vm772, %v774, %v770
        %v776 = vmul.f32 1.0, %v775
        %v777 = vsel %vm312, %v737, %v761
        %v778 = vsel %vm312, %v738, %v776
        %v779 = vmul.f32 %v777, %v682
        %v780 = vmul.f32 %v778, %v683
        %783 = vrot.lane.b32.xlu0 %v777, 64
        %v784 = vpop.permute.xlu0 %783
        %785 = vrot.lane.b32.xlu0 %v778, 64
        %v786 = vpop.permute.xlu0 %785
        %v789 = vmul.f32 %v777, %v784
        %v790 = vmul.f32 %v778, %v786
        %793 = vrot.lane.b32.xlu0 %v789, 32
        %v794 = vpop.permute.xlu0 %793
        %795 = vrot.lane.b32.xlu0 %v790, 32
        %v796 = vpop.permute.xlu0 %795
        %v799 = vadd.f32 %v779, %v794
        %v800 = vadd.f32 %v780, %v796
        %v801 = vtanh.pop %v799
        %v802 = vtanh.pop %v800
        %805 = vrot.lane.b32.xlu0 %v801, 64
        %v806 = vpop.permute.xlu0 %805
        %807 = vrot.lane.b32.xlu0 %v802, 64
        %v808 = vpop.permute.xlu0 %807
        %v811 = vmul.f32 %v777, %v806
        %v812 = vmul.f32 %v778, %v808
        %815 = vrot.lane.b32.xlu0 %v811, 32
        %v816 = vpop.permute.xlu0 %815
        %817 = vrot.lane.b32.xlu0 %v812, 32
        %v818 = vpop.permute.xlu0 %817
        %821 = vst.msk [vmem:[#allocation3 + $0x20] sm:$0xff] %vm474, %v816
        %822 = vst.msk [vmem:[#allocation3 + $0x28] sm:$0xff] %vm474, %v818
        %v823 = vld [vmem:[#allocation2 + $0x30] sm:$0xff]
        %v824 = vld [vmem:[#allocation2 + $0x38] sm:$0xff]
        %v825 = vsel %vm474, %v816, 0
        %v827 = vsel %vm474, %v818, 0
        %829 = vmatpush.msra.mxu0 0.0
        %830 = vmatpush.msra.mxu0 0.0
        %831 = vmatpush.msra.mxu0 0.0
        %832 = vmatpush.msra.mxu0 0.0
        %833 = vmatpush.msra.mxu0 0.0
        %834 = vmatpush.msra.mxu0 0.0
        %835 = vmatpush.msra.mxu0 0.0
        %836 = vmatpush.msra.mxu0 0.0
        %837 = vmatpush.msra.mxu0 0.0
        %838 = vmatpush.msra.mxu0 0.0
        %839 = vmatpush.msra.mxu0 0.0
        %840 = vmatpush.msra.mxu0 0.0
        %841 = vmatpush.msra.mxu0 %v317
        %842 = vmatpush.msra.mxu0 %v316
        %843 = vmatpush.msra.mxu0 %v315
        %844 = vmatpush.msra.mxu0 %v314
        %845 = vmatmul.f32.gmra.mxu0 %v825
        %v846 = vpop.f32.mrf.mxu0
        %v847 = vadd.f32 0.0, %v846
        %848 = vmatmul.f32.gmra.mxu0 %v827
        %v849 = vpop.f32.mrf.mxu0
        %v850 = vadd.f32 0.0, %v849
        %851 = vdwg.mxu0
        %v852 = vadd.f32 %v823, %v847
        %v853 = vadd.f32 %v824, %v850
        %v854 = vtanh.pop %v852
        %v855 = vtanh.pop %v853
        %v856 = vxor.u32 %v852, 2147483648
        %v857 = vxor.u32 %v853, 2147483648
        %v858 = vmul.f32 %v856, 1.442695
        %v859 = vpow.pop %v858
        %v860 = vmul.f32 %v857, 1.442695
        %v861 = vpow.pop %v860
        %v862 = vadd.f32 %v859, 1.0
        %v863 = vadd.f32 %v861, 1.0
        %v864 = vrcp.pop %v862
        %v865 = vmul.f32 %v862, %v864
        %v866 = vsub.f32 1.0, %v865
        %v867 = vmul.f32 %v864, %v866
        %v868 = vadd.f32 %v864, %v867
        %vm869 = vweird.f32 %v862
        %vm870 = vweird.f32 %v864
        %vm871 = vmor %vm869, %vm870
        %v872 = vsel %vm871, %v864, %v868
        %v873 = vand.u32 2147483647, %v862
        %vm874 = vcmp.eq.f32.partialorder %v873, 8.507059e+37
        %v875 = vand.u32 %v862, 2147483648
        %v876 = vor.u32 1.1754944e-38, %v875
        %v877 = vsel %vm874, %v876, %v872
        %v878 = vmul.f32 1.0, %v877
        %v879 = vrcp.pop %v863
        %v880 = vmul.f32 %v863, %v879
        %v881 = vsub.f32 1.0, %v880
        %v882 = vmul.f32 %v879, %v881
        %v883 = vadd.f32 %v879, %v882
        %vm884 = vweird.f32 %v863
        %vm885 = vweird.f32 %v879
        %vm886 = vmor %vm884, %vm885
        %v887 = vsel %vm886, %v879, %v883
        %v888 = vand.u32 2147483647, %v863
        %vm889 = vcmp.eq.f32.partialorder %v888, 8.507059e+37
        %v890 = vand.u32 %v863, 2147483648
        %v891 = vor.u32 1.1754944e-38, %v890
        %v892 = vsel %vm889, %v891, %v887
        %v893 = vmul.f32 1.0, %v892
        %v894 = vsel %vm312, %v854, %v878
        %v895 = vsel %vm312, %v855, %v893
        %v896 = vmul.f32 %v894, %v799
        %v897 = vmul.f32 %v895, %v800
        %900 = vrot.lane.b32.xlu0 %v894, 64
        %v901 = vpop.permute.xlu0 %900
        %902 = vrot.lane.b32.xlu0 %v895, 64
        %v903 = vpop.permute.xlu0 %902
        %v906 = vmul.f32 %v894, %v901
        %v907 = vmul.f32 %v895, %v903
        %910 = vrot.lane.b32.xlu0 %v906, 32
        %v911 = vpop.permute.xlu0 %910
        %912 = vrot.lane.b32.xlu0 %v907, 32
        %v913 = vpop.permute.xlu0 %912
        %v916 = vadd.f32 %v896, %v911
        %v917 = vadd.f32 %v897, %v913
        %v918 = vtanh.pop %v916
        %v919 = vtanh.pop %v917
        %922 = vrot.lane.b32.xlu0 %v918, 64
        %v923 = vpop.permute.xlu0 %922
        %924 = vrot.lane.b32.xlu0 %v919, 64
        %v925 = vpop.permute.xlu0 %924
        %v928 = vmul.f32 %v894, %v923
        %v929 = vmul.f32 %v895, %v925
        %932 = vrot.lane.b32.xlu0 %v928, 32
        %v933 = vpop.permute.xlu0 %932
        %934 = vrot.lane.b32.xlu0 %v929, 32
        %v935 = vpop.permute.xlu0 %934
        %938 = vst.msk [vmem:[#allocation3 + $0x30] sm:$0xff] %vm474, %v933
        %939 = vst.msk [vmem:[#allocation3 + $0x38] sm:$0xff] %vm474, %v935
        %v940 = vld [vmem:[#allocation2 + $0x40] sm:$0xff]
        %v941 = vld [vmem:[#allocation2 + $0x48] sm:$0xff]
        %v942 = vsel %vm474, %v933, 0
        %v944 = vsel %vm474, %v935, 0
        %946 = vmatpush.msra.mxu0 0.0
        %947 = vmatpush.msra.mxu0 0.0
        %948 = vmatpush.msra.mxu0 0.0
        %949 = vmatpush.msra.mxu0 0.0
        %950 = vmatpush.msra.mxu0 0.0
        %951 = vmatpush.msra.mxu0 0.0
        %952 = vmatpush.msra.mxu0 0.0
        %953 = vmatpush.msra.mxu0 0.0
        %954 = vmatpush.msra.mxu0 0.0
        %955 = vmatpush.msra.mxu0 0.0
        %956 = vmatpush.msra.mxu0 0.0
        %957 = vmatpush.msra.mxu0 0.0
        %958 = vmatpush.msra.mxu0 %v317
        %959 = vmatpush.msra.mxu0 %v316
        %960 = vmatpush.msra.mxu0 %v315
        %961 = vmatpush.msra.mxu0 %v314
        %962 = vmatmul.f32.gmra.mxu0 %v942
        %v963 = vpop.f32.mrf.mxu0
        %v964 = vadd.f32 0.0, %v963
        %965 = vmatmul.f32.gmra.mxu0 %v944
        %v966 = vpop.f32.mrf.mxu0
        %v967 = vadd.f32 0.0, %v966
        %968 = vdwg.mxu0
        %v969 = vadd.f32 %v940, %v964
        %v970 = vadd.f32 %v941, %v967
        %v971 = vtanh.pop %v969
        %v972 = vtanh.pop %v970
        %v973 = vxor.u32 %v969, 2147483648
        %v974 = vxor.u32 %v970, 2147483648
        %v975 = vmul.f32 %v973, 1.442695
        %v976 = vpow.pop %v975
        %v977 = vmul.f32 %v974, 1.442695
        %v978 = vpow.pop %v977
        %v979 = vadd.f32 %v976, 1.0
        %v980 = vadd.f32 %v978, 1.0
        %v981 = vrcp.pop %v979
        %v982 = vmul.f32 %v979, %v981
        %v983 = vsub.f32 1.0, %v982
        %v984 = vmul.f32 %v981, %v983
        %v985 = vadd.f32 %v981, %v984
        %vm986 = vweird.f32 %v979
        %vm987 = vweird.f32 %v981
        %vm988 = vmor %vm986, %vm987
        %v989 = vsel %vm988, %v981, %v985
        %v990 = vand.u32 2147483647, %v979
        %vm991 = vcmp.eq.f32.partialorder %v990, 8.507059e+37
        %v992 = vand.u32 %v979, 2147483648
        %v993 = vor.u32 1.1754944e-38, %v992
        %v994 = vsel %vm991, %v993, %v989
        %v995 = vmul.f32 1.0, %v994
        %v996 = vrcp.pop %v980
        %v997 = vmul.f32 %v980, %v996
        %v998 = vsub.f32 1.0, %v997
        %v999 = vmul.f32 %v996, %v998
        %v1000 = vadd.f32 %v996, %v999
        %vm1001 = vweird.f32 %v980
        %vm1002 = vweird.f32 %v996
        %vm1003 = vmor %vm1001, %vm1002
        %v1004 = vsel %vm1003, %v996, %v1000
        %v1005 = vand.u32 2147483647, %v980
        %vm1006 = vcmp.eq.f32.partialorder %v1005, 8.507059e+37
        %v1007 = vand.u32 %v980, 2147483648
        %v1008 = vor.u32 1.1754944e-38, %v1007
        %v1009 = vsel %vm1006, %v1008, %v1004
        %v1010 = vmul.f32 1.0, %v1009
        %v1011 = vsel %vm312, %v971, %v995
        %v1012 = vsel %vm312, %v972, %v1010
        %v1013 = vmul.f32 %v1011, %v916
        %v1014 = vmul.f32 %v1012, %v917
        %1017 = vrot.lane.b32.xlu0 %v1011, 64
        %v1018 = vpop.permute.xlu0 %1017
        %1019 = vrot.lane.b32.xlu0 %v1012, 64
        %v1020 = vpop.permute.xlu0 %1019
        %v1023 = vmul.f32 %v1011, %v1018
        %v1024 = vmul.f32 %v1012, %v1020
        %1027 = vrot.lane.b32.xlu0 %v1023, 32
        %v1028 = vpop.permute.xlu0 %1027
        %1029 = vrot.lane.b32.xlu0 %v1024, 32
        %v1030 = vpop.permute.xlu0 %1029
        %v1033 = vadd.f32 %v1013, %v1028
        %v1034 = vadd.f32 %v1014, %v1030
        %v1035 = vtanh.pop %v1033
        %v1036 = vtanh.pop %v1034
        %1039 = vrot.lane.b32.xlu0 %v1035, 64
        %v1040 = vpop.permute.xlu0 %1039
        %1041 = vrot.lane.b32.xlu0 %v1036, 64
        %v1042 = vpop.permute.xlu0 %1041
        %v1045 = vmul.f32 %v1011, %v1040
        %v1046 = vmul.f32 %v1012, %v1042
        %1049 = vrot.lane.b32.xlu0 %v1045, 32
        %v1050 = vpop.permute.xlu0 %1049
        %1051 = vrot.lane.b32.xlu0 %v1046, 32
        %v1052 = vpop.permute.xlu0 %1051
        %1055 = vst.msk [vmem:[#allocation3 + $0x40] sm:$0xff] %vm474, %v1050
        %1056 = vst.msk [vmem:[#allocation3 + $0x48] sm:$0xff] %vm474, %v1052
        %v1057 = vld [vmem:[#allocation2 + $0x50] sm:$0xff]
        %v1058 = vld [vmem:[#allocation2 + $0x58] sm:$0xff]
        %v1059 = vsel %vm474, %v1050, 0
        %v1061 = vsel %vm474, %v1052, 0
        %1063 = vmatpush.msra.mxu0 0.0
        %1064 = vmatpush.msra.mxu0 0.0
        %1065 = vmatpush.msra.mxu0 0.0
        %1066 = vmatpush.msra.mxu0 0.0
        %1067 = vmatpush.msra.mxu0 0.0
        %1068 = vmatpush.msra.mxu0 0.0
        %1069 = vmatpush.msra.mxu0 0.0
        %1070 = vmatpush.msra.mxu0 0.0
        %1071 = vmatpush.msra.mxu0 0.0
        %1072 = vmatpush.msra.mxu0 0.0
        %1073 = vmatpush.msra.mxu0 0.0
        %1074 = vmatpush.msra.mxu0 0.0
        %1075 = vmatpush.msra.mxu0 %v317
        %1076 = vmatpush.msra.mxu0 %v316
        %1077 = vmatpush.msra.mxu0 %v315
        %1078 = vmatpush.msra.mxu0 %v314
        %1079 = vmatmul.f32.gmra.mxu0 %v1059
        %v1080 = vpop.f32.mrf.mxu0
        %v1081 = vadd.f32 0.0, %v1080
        %1082 = vmatmul.f32.gmra.mxu0 %v1061
        %v1083 = vpop.f32.mrf.mxu0
        %v1084 = vadd.f32 0.0, %v1083
        %1085 = vdwg.mxu0
        %v1086 = vadd.f32 %v1057, %v1081
        %v1087 = vadd.f32 %v1058, %v1084
        %v1088 = vtanh.pop %v1086
        %v1089 = vtanh.pop %v1087
        %v1090 = vxor.u32 %v1086, 2147483648
        %v1091 = vxor.u32 %v1087, 2147483648
        %v1092 = vmul.f32 %v1090, 1.442695
        %v1093 = vpow.pop %v1092
        %v1094 = vmul.f32 %v1091, 1.442695
        %v1095 = vpow.pop %v1094
        %v1096 = vadd.f32 %v1093, 1.0
        %v1097 = vadd.f32 %v1095, 1.0
        %v1098 = vrcp.pop %v1096
        %v1099 = vmul.f32 %v1096, %v1098
        %v1100 = vsub.f32 1.0, %v1099
        %v1101 = vmul.f32 %v1098, %v1100
        %v1102 = vadd.f32 %v1098, %v1101
        %vm1103 = vweird.f32 %v1096
        %vm1104 = vweird.f32 %v1098
        %vm1105 = vmor %vm1103, %vm1104
        %v1106 = vsel %vm1105, %v1098, %v1102
        %v1107 = vand.u32 2147483647, %v1096
        %vm1108 = vcmp.eq.f32.partialorder %v1107, 8.507059e+37
        %v1109 = vand.u32 %v1096, 2147483648
        %v1110 = vor.u32 1.1754944e-38, %v1109
        %v1111 = vsel %vm1108, %v1110, %v1106
        %v1112 = vmul.f32 1.0, %v1111
        %v1113 = vrcp.pop %v1097
        %v1114 = vmul.f32 %v1097, %v1113
        %v1115 = vsub.f32 1.0, %v1114
        %v1116 = vmul.f32 %v1113, %v1115
        %v1117 = vadd.f32 %v1113, %v1116
        %vm1118 = vweird.f32 %v1097
        %vm1119 = vweird.f32 %v1113
        %vm1120 = vmor %vm1118, %vm1119
        %v1121 = vsel %vm1120, %v1113, %v1117
        %v1122 = vand.u32 2147483647, %v1097
        %vm1123 = vcmp.eq.f32.partialorder %v1122, 8.507059e+37
        %v1124 = vand.u32 %v1097, 2147483648
        %v1125 = vor.u32 1.1754944e-38, %v1124
        %v1126 = vsel %vm1123, %v1125, %v1121
        %v1127 = vmul.f32 1.0, %v1126
        %v1128 = vsel %vm312, %v1088, %v1112
        %v1129 = vsel %vm312, %v1089, %v1127
        %v1130 = vmul.f32 %v1128, %v1033
        %v1131 = vmul.f32 %v1129, %v1034
        %1134 = vrot.lane.b32.xlu0 %v1128, 64
        %v1135 = vpop.permute.xlu0 %1134
        %1136 = vrot.lane.b32.xlu0 %v1129, 64
        %v1137 = vpop.permute.xlu0 %1136
        %v1140 = vmul.f32 %v1128, %v1135
        %v1141 = vmul.f32 %v1129, %v1137
        %1144 = vrot.lane.b32.xlu0 %v1140, 32
        %v1145 = vpop.permute.xlu0 %1144
        %1146 = vrot.lane.b32.xlu0 %v1141, 32
        %v1147 = vpop.permute.xlu0 %1146
        %v1150 = vadd.f32 %v1130, %v1145
        %v1151 = vadd.f32 %v1131, %v1147
        %v1152 = vtanh.pop %v1150
        %v1153 = vtanh.pop %v1151
        %1156 = vrot.lane.b32.xlu0 %v1152, 64
        %v1157 = vpop.permute.xlu0 %1156
        %1158 = vrot.lane.b32.xlu0 %v1153, 64
        %v1159 = vpop.permute.xlu0 %1158
        %v1162 = vmul.f32 %v1128, %v1157
        %v1163 = vmul.f32 %v1129, %v1159
        %1166 = vrot.lane.b32.xlu0 %v1162, 32
        %v1167 = vpop.permute.xlu0 %1166
        %1168 = vrot.lane.b32.xlu0 %v1163, 32
        %v1169 = vpop.permute.xlu0 %1168
        %1172 = vst.msk [vmem:[#allocation3 + $0x50] sm:$0xff] %vm474, %v1167
        %1173 = vst.msk [vmem:[#allocation3 + $0x58] sm:$0xff] %vm474, %v1169
        %v1174 = vld [vmem:[#allocation2 + $0x60] sm:$0xff]
        %v1175 = vld [vmem:[#allocation2 + $0x68] sm:$0xff]
        %v1176 = vsel %vm474, %v1167, 0
        %v1178 = vsel %vm474, %v1169, 0
        %1180 = vmatpush.msra.mxu0 0.0
        %1181 = vmatpush.msra.mxu0 0.0
        %1182 = vmatpush.msra.mxu0 0.0
        %1183 = vmatpush.msra.mxu0 0.0
        %1184 = vmatpush.msra.mxu0 0.0
        %1185 = vmatpush.msra.mxu0 0.0
        %1186 = vmatpush.msra.mxu0 0.0
        %1187 = vmatpush.msra.mxu0 0.0
        %1188 = vmatpush.msra.mxu0 0.0
        %1189 = vmatpush.msra.mxu0 0.0
        %1190 = vmatpush.msra.mxu0 0.0
        %1191 = vmatpush.msra.mxu0 0.0
        %1192 = vmatpush.msra.mxu0 %v317
        %1193 = vmatpush.msra.mxu0 %v316
        %1194 = vmatpush.msra.mxu0 %v315
        %1195 = vmatpush.msra.mxu0 %v314
        %1196 = vmatmul.f32.gmra.mxu0 %v1176
        %v1197 = vpop.f32.mrf.mxu0
        %v1198 = vadd.f32 0.0, %v1197
        %1199 = vmatmul.f32.gmra.mxu0 %v1178
        %v1200 = vpop.f32.mrf.mxu0
        %v1201 = vadd.f32 0.0, %v1200
        %1202 = vdwg.mxu0
        %v1203 = vadd.f32 %v1174, %v1198
        %v1204 = vadd.f32 %v1175, %v1201
        %v1205 = vtanh.pop %v1203
        %v1206 = vtanh.pop %v1204
        %v1207 = vxor.u32 %v1203, 2147483648
        %v1208 = vxor.u32 %v1204, 2147483648
        %v1209 = vmul.f32 %v1207, 1.442695
        %v1210 = vpow.pop %v1209
        %v1211 = vmul.f32 %v1208, 1.442695
        %v1212 = vpow.pop %v1211
        %v1213 = vadd.f32 %v1210, 1.0
        %v1214 = vadd.f32 %v1212, 1.0
        %v1215 = vrcp.pop %v1213
        %v1216 = vmul.f32 %v1213, %v1215
        %v1217 = vsub.f32 1.0, %v1216
        %v1218 = vmul.f32 %v1215, %v1217
        %v1219 = vadd.f32 %v1215, %v1218
        %vm1220 = vweird.f32 %v1213
        %vm1221 = vweird.f32 %v1215
        %vm1222 = vmor %vm1220, %vm1221
        %v1223 = vsel %vm1222, %v1215, %v1219
        %v1224 = vand.u32 2147483647, %v1213
        %vm1225 = vcmp.eq.f32.partialorder %v1224, 8.507059e+37
        %v1226 = vand.u32 %v1213, 2147483648
        %v1227 = vor.u32 1.1754944e-38, %v1226
        %v1228 = vsel %vm1225, %v1227, %v1223
        %v1229 = vmul.f32 1.0, %v1228
        %v1230 = vrcp.pop %v1214
        %v1231 = vmul.f32 %v1214, %v1230
        %v1232 = vsub.f32 1.0, %v1231
        %v1233 = vmul.f32 %v1230, %v1232
        %v1234 = vadd.f32 %v1230, %v1233
        %vm1235 = vweird.f32 %v1214
        %vm1236 = vweird.f32 %v1230
        %vm1237 = vmor %vm1235, %vm1236
        %v1238 = vsel %vm1237, %v1230, %v1234
        %v1239 = vand.u32 2147483647, %v1214
        %vm1240 = vcmp.eq.f32.partialorder %v1239, 8.507059e+37
        %v1241 = vand.u32 %v1214, 2147483648
        %v1242 = vor.u32 1.1754944e-38, %v1241
        %v1243 = vsel %vm1240, %v1242, %v1238
        %v1244 = vmul.f32 1.0, %v1243
        %v1245 = vsel %vm312, %v1205, %v1229
        %v1246 = vsel %vm312, %v1206, %v1244
        %v1247 = vmul.f32 %v1245, %v1150
        %v1248 = vmul.f32 %v1246, %v1151
        %1251 = vrot.lane.b32.xlu0 %v1245, 64
        %v1252 = vpop.permute.xlu0 %1251
        %1253 = vrot.lane.b32.xlu0 %v1246, 64
        %v1254 = vpop.permute.xlu0 %1253
        %v1257 = vmul.f32 %v1245, %v1252
        %v1258 = vmul.f32 %v1246, %v1254
        %1261 = vrot.lane.b32.xlu0 %v1257, 32
        %v1262 = vpop.permute.xlu0 %1261
        %1263 = vrot.lane.b32.xlu0 %v1258, 32
        %v1264 = vpop.permute.xlu0 %1263
        %v1267 = vadd.f32 %v1247, %v1262
        %v1268 = vadd.f32 %v1248, %v1264
        %v1269 = vtanh.pop %v1267
        %v1270 = vtanh.pop %v1268
        %1273 = vrot.lane.b32.xlu0 %v1269, 64
        %v1274 = vpop.permute.xlu0 %1273
        %1275 = vrot.lane.b32.xlu0 %v1270, 64
        %v1276 = vpop.permute.xlu0 %1275
        %v1279 = vmul.f32 %v1245, %v1274
        %v1280 = vmul.f32 %v1246, %v1276
        %1283 = vrot.lane.b32.xlu0 %v1279, 32
        %v1284 = vpop.permute.xlu0 %1283
        %1285 = vrot.lane.b32.xlu0 %v1280, 32
        %v1286 = vpop.permute.xlu0 %1285
        %1289 = vst.msk [vmem:[#allocation3 + $0x60] sm:$0xff] %vm474, %v1284
        %1290 = vst.msk [vmem:[#allocation3 + $0x68] sm:$0xff] %vm474, %v1286
        %v1291 = vld [vmem:[#allocation2 + $0x70] sm:$0xff]
        %v1292 = vld [vmem:[#allocation2 + $0x78] sm:$0xff]
        %v1293 = vsel %vm474, %v1284, 0
        %v1295 = vsel %vm474, %v1286, 0
        %1297 = vmatpush.msra.mxu0 0.0
        %1298 = vmatpush.msra.mxu0 0.0
        %1299 = vmatpush.msra.mxu0 0.0
        %1300 = vmatpush.msra.mxu0 0.0
        %1301 = vmatpush.msra.mxu0 0.0
        %1302 = vmatpush.msra.mxu0 0.0
        %1303 = vmatpush.msra.mxu0 0.0
        %1304 = vmatpush.msra.mxu0 0.0
        %1305 = vmatpush.msra.mxu0 0.0
        %1306 = vmatpush.msra.mxu0 0.0
        %1307 = vmatpush.msra.mxu0 0.0
        %1308 = vmatpush.msra.mxu0 0.0
        %1309 = vmatpush.msra.mxu0 %v317
        %1310 = vmatpush.msra.mxu0 %v316
        %1311 = vmatpush.msra.mxu0 %v315
        %1312 = vmatpush.msra.mxu0 %v314
        %1313 = vmatmul.f32.gmra.mxu0 %v1293
        %v1314 = vpop.f32.mrf.mxu0
        %v1315 = vadd.f32 0.0, %v1314
        %1316 = vmatmul.f32.gmra.mxu0 %v1295
        %v1317 = vpop.f32.mrf.mxu0
        %v1318 = vadd.f32 0.0, %v1317
        %1319 = vdwg.mxu0
        %v1320 = vadd.f32 %v1291, %v1315
        %v1321 = vadd.f32 %v1292, %v1318
        %v1322 = vtanh.pop %v1320
        %v1323 = vtanh.pop %v1321
        %v1324 = vxor.u32 %v1320, 2147483648
        %v1325 = vxor.u32 %v1321, 2147483648
        %v1326 = vmul.f32 %v1324, 1.442695
        %v1327 = vpow.pop %v1326
        %v1328 = vmul.f32 %v1325, 1.442695
        %v1329 = vpow.pop %v1328
        %v1330 = vadd.f32 %v1327, 1.0
        %v1331 = vadd.f32 %v1329, 1.0
        %v1332 = vrcp.pop %v1330
        %v1333 = vmul.f32 %v1330, %v1332
        %v1334 = vsub.f32 1.0, %v1333
        %v1335 = vmul.f32 %v1332, %v1334
        %v1336 = vadd.f32 %v1332, %v1335
        %vm1337 = vweird.f32 %v1330
        %vm1338 = vweird.f32 %v1332
        %vm1339 = vmor %vm1337, %vm1338
        %v1340 = vsel %vm1339, %v1332, %v1336
        %v1341 = vand.u32 2147483647, %v1330
        %vm1342 = vcmp.eq.f32.partialorder %v1341, 8.507059e+37
        %v1343 = vand.u32 %v1330, 2147483648
        %v1344 = vor.u32 1.1754944e-38, %v1343
        %v1345 = vsel %vm1342, %v1344, %v1340
        %v1346 = vmul.f32 1.0, %v1345
        %v1347 = vrcp.pop %v1331
        %v1348 = vmul.f32 %v1331, %v1347
        %v1349 = vsub.f32 1.0, %v1348
        %v1350 = vmul.f32 %v1347, %v1349
        %v1351 = vadd.f32 %v1347, %v1350
        %vm1352 = vweird.f32 %v1331
        %vm1353 = vweird.f32 %v1347
        %vm1354 = vmor %vm1352, %vm1353
        %v1355 = vsel %vm1354, %v1347, %v1351
        %v1356 = vand.u32 2147483647, %v1331
        %vm1357 = vcmp.eq.f32.partialorder %v1356, 8.507059e+37
        %v1358 = vand.u32 %v1331, 2147483648
        %v1359 = vor.u32 1.1754944e-38, %v1358
        %v1360 = vsel %vm1357, %v1359, %v1355
        %v1361 = vmul.f32 1.0, %v1360
        %v1362 = vsel %vm312, %v1322, %v1346
        %v1363 = vsel %vm312, %v1323, %v1361
        %v1364 = vmul.f32 %v1362, %v1267
        %v1365 = vmul.f32 %v1363, %v1268
        %1368 = vrot.lane.b32.xlu0 %v1362, 64
        %v1369 = vpop.permute.xlu0 %1368
        %1370 = vrot.lane.b32.xlu0 %v1363, 64
        %v1371 = vpop.permute.xlu0 %1370
        %v1374 = vmul.f32 %v1362, %v1369
        %v1375 = vmul.f32 %v1363, %v1371
        %1378 = vrot.lane.b32.xlu0 %v1374, 32
        %v1379 = vpop.permute.xlu0 %1378
        %1380 = vrot.lane.b32.xlu0 %v1375, 32
        %v1381 = vpop.permute.xlu0 %1380
        %v1384 = vadd.f32 %v1364, %v1379
        %v1385 = vadd.f32 %v1365, %v1381
        %v1386 = vtanh.pop %v1384
        %v1387 = vtanh.pop %v1385
        %1390 = vrot.lane.b32.xlu0 %v1386, 64
        %v1391 = vpop.permute.xlu0 %1390
        %1392 = vrot.lane.b32.xlu0 %v1387, 64
        %v1393 = vpop.permute.xlu0 %1392
        %v1396 = vmul.f32 %v1362, %v1391
        %v1397 = vmul.f32 %v1363, %v1393
        %1400 = vrot.lane.b32.xlu0 %v1396, 32
        %v1401 = vpop.permute.xlu0 %1400
        %1402 = vrot.lane.b32.xlu0 %v1397, 32
        %v1403 = vpop.permute.xlu0 %1402
        %1406 = vst.msk [vmem:[#allocation3 + $0x70] sm:$0xff] %vm474, %v1401
        %1407 = vst.msk [vmem:[#allocation3 + $0x78] sm:$0xff] %vm474, %v1403
        %v1408 = vld [vmem:[%s4] sm:$0xff]
        %v1409 = vld [vmem:[%s4 + $0x8] sm:$0xff]
        %v1410 = vld [vmem:[%s4 + $0x10] sm:$0xff]
        %v1411 = vld [vmem:[%s4 + $0x18] sm:$0xff]
        %v1412 = vld [vmem:[%s5] sm:$0xff]
        %v1413 = vld [vmem:[%s5 + $0x8] sm:$0xff]
        %v1414 = vld [vmem:[%s5 + $0x10] sm:$0xff]
        %v1415 = vld [vmem:[%s5 + $0x18] sm:$0xff]
        %v1416 = vld [vmem:[%s6] sm:$0x1]
        %v1417 = vld [vmem:[#allocation3] sm:$0xff]
        %v1418 = vld [vmem:[#allocation3 + $0x8] sm:$0xff]
        %v1419 = vld [vmem:[#allocation3 + $0x10] sm:$0xff]
        %v1420 = vld [vmem:[#allocation3 + $0x18] sm:$0xff]
        %v1421 = vld [vmem:[#allocation3 + $0x20] sm:$0xff]
        %v1422 = vld [vmem:[#allocation3 + $0x28] sm:$0xff]
        %v1423 = vld [vmem:[#allocation3 + $0x30] sm:$0xff]
        %v1424 = vld [vmem:[#allocation3 + $0x38] sm:$0xff]
        %v1425 = vld [vmem:[#allocation3 + $0x40] sm:$0xff]
        %v1426 = vld [vmem:[#allocation3 + $0x48] sm:$0xff]
        %v1427 = vld [vmem:[#allocation3 + $0x50] sm:$0xff]
        %v1428 = vld [vmem:[#allocation3 + $0x58] sm:$0xff]
        %v1429 = vld [vmem:[#allocation3 + $0x60] sm:$0xff]
        %v1430 = vld [vmem:[#allocation3 + $0x68] sm:$0xff]
        %v1431 = vld [vmem:[#allocation3 + $0x70] sm:$0xff]
        %v1432 = vld [vmem:[#allocation3 + $0x78] sm:$0xff]
        %v1434 = vperm.slane %v1416, 0
        %v1437 = vsel %vm474, %v1417, 0
        %v1440 = vsel %vm474, %v1418, 0
        %v1443 = vsel %vm474, %v1419, 0
        %v1446 = vsel %vm474, %v1420, 0
        %v1449 = vsel %vm474, %v1421, 0
        %v1452 = vsel %vm474, %v1422, 0
        %v1455 = vsel %vm474, %v1423, 0
        %v1458 = vsel %vm474, %v1424, 0
        %v1461 = vsel %vm474, %v1425, 0
        %v1464 = vsel %vm474, %v1426, 0
        %v1467 = vsel %vm474, %v1427, 0
        %v1470 = vsel %vm474, %v1428, 0
        %v1473 = vsel %vm474, %v1429, 0
        %v1476 = vsel %vm474, %v1430, 0
        %v1479 = vsel %vm474, %v1431, 0
        %v1482 = vsel %vm474, %v1432, 0
        %1484 = vmatpush.msra.mxu0 0.0
        %1485 = vmatpush.msra.mxu0 0.0
        %1486 = vmatpush.msra.mxu0 0.0
        %1487 = vmatpush.msra.mxu0 0.0
        %1488 = vmatpush.msra.mxu0 0.0
        %1489 = vmatpush.msra.mxu0 0.0
        %1490 = vmatpush.msra.mxu0 0.0
        %1491 = vmatpush.msra.mxu0 0.0
        %1492 = vmatpush.msra.mxu0 0.0
        %1493 = vmatpush.msra.mxu0 0.0
        %1494 = vmatpush.msra.mxu0 0.0
        %1495 = vmatpush.msra.mxu0 0.0
        %1496 = vmatpush.msra.mxu0 %v1411
        %1497 = vmatpush.msra.mxu0 %v1410
        %1498 = vmatpush.msra.mxu0 %v1409
        %1499 = vmatpush.msra.mxu0 %v1408
        %1500 = vmatmul.f32.gmra.mxu0 %v1437
        %v1501 = vpop.f32.mrf.mxu0
        %v1502 = vadd.f32 %v1434, %v1501
        %1503 = vmatmul.f32.gmra.mxu0 %v1440
        %v1504 = vpop.f32.mrf.mxu0
        %v1505 = vadd.f32 %v1434, %v1504
        %1506 = vmatmul.f32.gmra.mxu0 %v1443
        %v1507 = vpop.f32.mrf.mxu0
        %v1508 = vadd.f32 %v1434, %v1507
        %1509 = vmatmul.f32.gmra.mxu0 %v1446
        %v1510 = vpop.f32.mrf.mxu0
        %v1511 = vadd.f32 %v1434, %v1510
        %1512 = vmatmul.f32.gmra.mxu0 %v1449
        %v1513 = vpop.f32.mrf.mxu0
        %v1514 = vadd.f32 %v1434, %v1513
        %1515 = vmatmul.f32.gmra.mxu0 %v1452
        %v1516 = vpop.f32.mrf.mxu0
        %v1517 = vadd.f32 %v1434, %v1516
        %1518 = vmatmul.f32.gmra.mxu0 %v1455
        %v1519 = vpop.f32.mrf.mxu0
        %v1520 = vadd.f32 %v1434, %v1519
        %1521 = vmatmul.f32.gmra.mxu0 %v1458
        %v1522 = vpop.f32.mrf.mxu0
        %v1523 = vadd.f32 %v1434, %v1522
        %1524 = vmatmul.f32.gmra.mxu0 %v1461
        %v1525 = vpop.f32.mrf.mxu0
        %v1526 = vadd.f32 %v1434, %v1525
        %1527 = vmatmul.f32.gmra.mxu0 %v1464
        %v1528 = vpop.f32.mrf.mxu0
        %v1529 = vadd.f32 %v1434, %v1528
        %1530 = vmatmul.f32.gmra.mxu0 %v1467
        %v1531 = vpop.f32.mrf.mxu0
        %v1532 = vadd.f32 %v1434, %v1531
        %1533 = vmatmul.f32.gmra.mxu0 %v1470
        %v1534 = vpop.f32.mrf.mxu0
        %v1535 = vadd.f32 %v1434, %v1534
        %1536 = vmatmul.f32.gmra.mxu0 %v1473
        %v1537 = vpop.f32.mrf.mxu0
        %v1538 = vadd.f32 %v1434, %v1537
        %1539 = vmatmul.f32.gmra.mxu0 %v1476
        %v1540 = vpop.f32.mrf.mxu0
        %v1541 = vadd.f32 %v1434, %v1540
        %1542 = vmatmul.f32.gmra.mxu0 %v1479
        %v1543 = vpop.f32.mrf.mxu0
        %v1544 = vadd.f32 %v1434, %v1543
        %1545 = vmatmul.f32.gmra.mxu0 %v1482
        %v1546 = vpop.f32.mrf.mxu0
        %v1547 = vadd.f32 %v1434, %v1546
        %1548 = vdwg.mxu0
        %1549 = vst [vmem:[#allocation2] sm:$0xff] %v1502
        %1550 = vst [vmem:[#allocation2 + $0x8] sm:$0xff] %v1505
        %1551 = vst [vmem:[#allocation2 + $0x10] sm:$0xff] %v1508
        %1552 = vst [vmem:[#allocation2 + $0x18] sm:$0xff] %v1511
        %1553 = vst [vmem:[#allocation2 + $0x20] sm:$0xff] %v1514
        %1554 = vst [vmem:[#allocation2 + $0x28] sm:$0xff] %v1517
        %1555 = vst [vmem:[#allocation2 + $0x30] sm:$0xff] %v1520
        %1556 = vst [vmem:[#allocation2 + $0x38] sm:$0xff] %v1523
        %1557 = vst [vmem:[#allocation2 + $0x40] sm:$0xff] %v1526
        %1558 = vst [vmem:[#allocation2 + $0x48] sm:$0xff] %v1529
        %1559 = vst [vmem:[#allocation2 + $0x50] sm:$0xff] %v1532
        %1560 = vst [vmem:[#allocation2 + $0x58] sm:$0xff] %v1535
        %1561 = vst [vmem:[#allocation2 + $0x60] sm:$0xff] %v1538
        %1562 = vst [vmem:[#allocation2 + $0x68] sm:$0xff] %v1541
        %1563 = vst [vmem:[#allocation2 + $0x70] sm:$0xff] %v1544
        %1564 = vst [vmem:[#allocation2 + $0x78] sm:$0xff] %v1547
        %v1565 = vld [vmem:[#allocation2] sm:$0xff]
        %v1566 = vld [vmem:[#allocation2 + $0x8] sm:$0xff]
        %1567 = vmatpush.msra.mxu0 0.0
        %1568 = vmatpush.msra.mxu0 0.0
        %1569 = vmatpush.msra.mxu0 0.0
        %1570 = vmatpush.msra.mxu0 0.0
        %1571 = vmatpush.msra.mxu0 0.0
        %1572 = vmatpush.msra.mxu0 0.0
        %1573 = vmatpush.msra.mxu0 0.0
        %1574 = vmatpush.msra.mxu0 0.0
        %1575 = vmatpush.msra.mxu0 0.0
        %1576 = vmatpush.msra.mxu0 0.0
        %1577 = vmatpush.msra.mxu0 0.0
        %1578 = vmatpush.msra.mxu0 0.0
        %1579 = vmatpush.msra.mxu0 %v1415
        %1580 = vmatpush.msra.mxu0 %v1414
        %1581 = vmatpush.msra.mxu0 %v1413
        %1582 = vmatpush.msra.mxu0 %v1412
        %1583 = vmatmul.f32.gmra.mxu0 %v476
        %v1584 = vpop.f32.mrf.mxu0
        %v1585 = vadd.f32 0.0, %v1584
        %1586 = vmatmul.f32.gmra.mxu0 %v476
        %v1587 = vpop.f32.mrf.mxu0
        %v1588 = vadd.f32 0.0, %v1587
        %1589 = vdwg.mxu0
        %v1590 = vadd.f32 %v1565, %v1585
        %v1591 = vadd.f32 %v1566, %v1588
        %v1592 = vtanh.pop %v1590
        %v1593 = vtanh.pop %v1591
        %v1594 = vxor.u32 %v1590, 2147483648
        %v1595 = vxor.u32 %v1591, 2147483648
        %v1596 = vmul.f32 %v1594, 1.442695
        %v1597 = vpow.pop %v1596
        %v1598 = vmul.f32 %v1595, 1.442695
        %v1599 = vpow.pop %v1598
        %v1600 = vadd.f32 %v1597, 1.0
        %v1601 = vadd.f32 %v1599, 1.0
        %v1602 = vrcp.pop %v1600
        %v1603 = vmul.f32 %v1600, %v1602
        %v1604 = vsub.f32 1.0, %v1603
        %v1605 = vmul.f32 %v1602, %v1604
        %v1606 = vadd.f32 %v1602, %v1605
        %vm1607 = vweird.f32 %v1600
        %vm1608 = vweird.f32 %v1602
        %vm1609 = vmor %vm1607, %vm1608
        %v1610 = vsel %vm1609, %v1602, %v1606
        %v1611 = vand.u32 2147483647, %v1600
        %vm1612 = vcmp.eq.f32.partialorder %v1611, 8.507059e+37
        %v1613 = vand.u32 %v1600, 2147483648
        %v1614 = vor.u32 1.1754944e-38, %v1613
        %v1615 = vsel %vm1612, %v1614, %v1610
        %v1616 = vmul.f32 1.0, %v1615
        %v1617 = vrcp.pop %v1601
        %v1618 = vmul.f32 %v1601, %v1617
        %v1619 = vsub.f32 1.0, %v1618
        %v1620 = vmul.f32 %v1617, %v1619
        %v1621 = vadd.f32 %v1617, %v1620
        %vm1622 = vweird.f32 %v1601
        %vm1623 = vweird.f32 %v1617
        %vm1624 = vmor %vm1622, %vm1623
        %v1625 = vsel %vm1624, %v1617, %v1621
        %v1626 = vand.u32 2147483647, %v1601
        %vm1627 = vcmp.eq.f32.partialorder %v1626, 8.507059e+37
        %v1628 = vand.u32 %v1601, 2147483648
        %v1629 = vor.u32 1.1754944e-38, %v1628
        %v1630 = vsel %vm1627, %v1629, %v1625
        %v1631 = vmul.f32 1.0, %v1630
        %v1632 = vsel %vm312, %v1592, %v1616
        %v1633 = vsel %vm312, %v1593, %v1631
        %v1634 = vmul.f32 %v1632, 0.0
        %v1635 = vmul.f32 %v1633, 0.0
        %1638 = vrot.lane.b32.xlu0 %v1632, 64
        %v1639 = vpop.permute.xlu0 %1638
        %1640 = vrot.lane.b32.xlu0 %v1633, 64
        %v1641 = vpop.permute.xlu0 %1640
        %v1644 = vmul.f32 %v1632, %v1639
        %v1645 = vmul.f32 %v1633, %v1641
        %1648 = vrot.lane.b32.xlu0 %v1644, 32
        %v1649 = vpop.permute.xlu0 %1648
        %1650 = vrot.lane.b32.xlu0 %v1645, 32
        %v1651 = vpop.permute.xlu0 %1650
        %v1654 = vadd.f32 %v1634, %v1649
        %v1655 = vadd.f32 %v1635, %v1651
        %v1656 = vtanh.pop %v1654
        %v1657 = vtanh.pop %v1655
        %1660 = vrot.lane.b32.xlu0 %v1656, 64
        %v1661 = vpop.permute.xlu0 %1660
        %1662 = vrot.lane.b32.xlu0 %v1657, 64
        %v1663 = vpop.permute.xlu0 %1662
        %v1666 = vmul.f32 %v1632, %v1661
        %v1667 = vmul.f32 %v1633, %v1663
        %v1668 = vld [vmem:[#allocation2 + $0x10] sm:$0xff]
        %v1669 = vld [vmem:[#allocation2 + $0x18] sm:$0xff]
        %1672 = vrot.lane.b32.xlu0 %v1666, 32
        %v1673 = vpop.permute.xlu0 %1672
        %1674 = vrot.lane.b32.xlu0 %v1667, 32
        %v1675 = vpop.permute.xlu0 %1674
        %v1676 = vsel %vm474, %v1673, 0
        %v1678 = vsel %vm474, %v1675, 0
        %1680 = vmatpush.msra.mxu0 0.0
        %1681 = vmatpush.msra.mxu0 0.0
        %1682 = vmatpush.msra.mxu0 0.0
        %1683 = vmatpush.msra.mxu0 0.0
        %1684 = vmatpush.msra.mxu0 0.0
        %1685 = vmatpush.msra.mxu0 0.0
        %1686 = vmatpush.msra.mxu0 0.0
        %1687 = vmatpush.msra.mxu0 0.0
        %1688 = vmatpush.msra.mxu0 0.0
        %1689 = vmatpush.msra.mxu0 0.0
        %1690 = vmatpush.msra.mxu0 0.0
        %1691 = vmatpush.msra.mxu0 0.0
        %1692 = vmatpush.msra.mxu0 %v1415
        %1693 = vmatpush.msra.mxu0 %v1414
        %1694 = vmatpush.msra.mxu0 %v1413
        %1695 = vmatpush.msra.mxu0 %v1412
        %1696 = vmatmul.f32.gmra.mxu0 %v1676
        %v1697 = vpop.f32.mrf.mxu0
        %v1698 = vadd.f32 0.0, %v1697
        %1699 = vmatmul.f32.gmra.mxu0 %v1678
        %v1700 = vpop.f32.mrf.mxu0
        %v1701 = vadd.f32 0.0, %v1700
        %1702 = vdwg.mxu0
        %v1703 = vadd.f32 %v1668, %v1698
        %v1704 = vadd.f32 %v1669, %v1701
        %v1705 = vtanh.pop %v1703
        %v1706 = vtanh.pop %v1704
        %v1707 = vxor.u32 %v1703, 2147483648
        %v1708 = vxor.u32 %v1704, 2147483648
        %v1709 = vmul.f32 %v1707, 1.442695
        %v1710 = vpow.pop %v1709
        %v1711 = vmul.f32 %v1708, 1.442695
        %v1712 = vpow.pop %v1711
        %v1713 = vadd.f32 %v1710, 1.0
        %v1714 = vadd.f32 %v1712, 1.0
        %v1715 = vrcp.pop %v1713
        %v1716 = vmul.f32 %v1713, %v1715
        %v1717 = vsub.f32 1.0, %v1716
        %v1718 = vmul.f32 %v1715, %v1717
        %v1719 = vadd.f32 %v1715, %v1718
        %vm1720 = vweird.f32 %v1713
        %vm1721 = vweird.f32 %v1715
        %vm1722 = vmor %vm1720, %vm1721
        %v1723 = vsel %vm1722, %v1715, %v1719
        %v1724 = vand.u32 2147483647, %v1713
        %vm1725 = vcmp.eq.f32.partialorder %v1724, 8.507059e+37
        %v1726 = vand.u32 %v1713, 2147483648
        %v1727 = vor.u32 1.1754944e-38, %v1726
        %v1728 = vsel %vm1725, %v1727, %v1723
        %v1729 = vmul.f32 1.0, %v1728
        %v1730 = vrcp.pop %v1714
        %v1731 = vmul.f32 %v1714, %v1730
        %v1732 = vsub.f32 1.0, %v1731
        %v1733 = vmul.f32 %v1730, %v1732
        %v1734 = vadd.f32 %v1730, %v1733
        %vm1735 = vweird.f32 %v1714
        %vm1736 = vweird.f32 %v1730
        %vm1737 = vmor %vm1735, %vm1736
        %v1738 = vsel %vm1737, %v1730, %v1734
        %v1739 = vand.u32 2147483647, %v1714
        %vm1740 = vcmp.eq.f32.partialorder %v1739, 8.507059e+37
        %v1741 = vand.u32 %v1714, 2147483648
        %v1742 = vor.u32 1.1754944e-38, %v1741
        %v1743 = vsel %vm1740, %v1742, %v1738
        %v1744 = vmul.f32 1.0, %v1743
        %v1745 = vsel %vm312, %v1705, %v1729
        %v1746 = vsel %vm312, %v1706, %v1744
        %v1747 = vmul.f32 %v1745, %v1654
        %v1748 = vmul.f32 %v1746, %v1655
        %1751 = vrot.lane.b32.xlu0 %v1745, 64
        %v1752 = vpop.permute.xlu0 %1751
        %1753 = vrot.lane.b32.xlu0 %v1746, 64
        %v1754 = vpop.permute.xlu0 %1753
        %v1757 = vmul.f32 %v1745, %v1752
        %v1758 = vmul.f32 %v1746, %v1754
        %1761 = vrot.lane.b32.xlu0 %v1757, 32
        %v1762 = vpop.permute.xlu0 %1761
        %1763 = vrot.lane.b32.xlu0 %v1758, 32
        %v1764 = vpop.permute.xlu0 %1763
        %v1767 = vadd.f32 %v1747, %v1762
        %v1768 = vadd.f32 %v1748, %v1764
        %v1769 = vtanh.pop %v1767
        %v1770 = vtanh.pop %v1768
        %1773 = vrot.lane.b32.xlu0 %v1769, 64
        %v1774 = vpop.permute.xlu0 %1773
        %1775 = vrot.lane.b32.xlu0 %v1770, 64
        %v1776 = vpop.permute.xlu0 %1775
        %v1779 = vmul.f32 %v1745, %v1774
        %v1780 = vmul.f32 %v1746, %v1776
        %v1781 = vld [vmem:[#allocation2 + $0x20] sm:$0xff]
        %v1782 = vld [vmem:[#allocation2 + $0x28] sm:$0xff]
        %1785 = vrot.lane.b32.xlu0 %v1779, 32
        %v1786 = vpop.permute.xlu0 %1785
        %1787 = vrot.lane.b32.xlu0 %v1780, 32
        %v1788 = vpop.permute.xlu0 %1787
        %v1789 = vsel %vm474, %v1786, 0
        %v1791 = vsel %vm474, %v1788, 0
        %1793 = vmatpush.msra.mxu0 0.0
        %1794 = vmatpush.msra.mxu0 0.0
        %1795 = vmatpush.msra.mxu0 0.0
        %1796 = vmatpush.msra.mxu0 0.0
        %1797 = vmatpush.msra.mxu0 0.0
        %1798 = vmatpush.msra.mxu0 0.0
        %1799 = vmatpush.msra.mxu0 0.0
        %1800 = vmatpush.msra.mxu0 0.0
        %1801 = vmatpush.msra.mxu0 0.0
        %1802 = vmatpush.msra.mxu0 0.0
        %1803 = vmatpush.msra.mxu0 0.0
        %1804 = vmatpush.msra.mxu0 0.0
        %1805 = vmatpush.msra.mxu0 %v1415
        %1806 = vmatpush.msra.mxu0 %v1414
        %1807 = vmatpush.msra.mxu0 %v1413
        %1808 = vmatpush.msra.mxu0 %v1412
        %1809 = vmatmul.f32.gmra.mxu0 %v1789
        %v1810 = vpop.f32.mrf.mxu0
        %v1811 = vadd.f32 0.0, %v1810
        %1812 = vmatmul.f32.gmra.mxu0 %v1791
        %v1813 = vpop.f32.mrf.mxu0
        %v1814 = vadd.f32 0.0, %v1813
        %1815 = vdwg.mxu0
        %v1816 = vadd.f32 %v1781, %v1811
        %v1817 = vadd.f32 %v1782, %v1814
        %v1818 = vtanh.pop %v1816
        %v1819 = vtanh.pop %v1817
        %v1820 = vxor.u32 %v1816, 2147483648
        %v1821 = vxor.u32 %v1817, 2147483648
        %v1822 = vmul.f32 %v1820, 1.442695
        %v1823 = vpow.pop %v1822
        %v1824 = vmul.f32 %v1821, 1.442695
        %v1825 = vpow.pop %v1824
        %v1826 = vadd.f32 %v1823, 1.0
        %v1827 = vadd.f32 %v1825, 1.0
        %v1828 = vrcp.pop %v1826
        %v1829 = vmul.f32 %v1826, %v1828
        %v1830 = vsub.f32 1.0, %v1829
        %v1831 = vmul.f32 %v1828, %v1830
        %v1832 = vadd.f32 %v1828, %v1831
        %vm1833 = vweird.f32 %v1826
        %vm1834 = vweird.f32 %v1828
        %vm1835 = vmor %vm1833, %vm1834
        %v1836 = vsel %vm1835, %v1828, %v1832
        %v1837 = vand.u32 2147483647, %v1826
        %vm1838 = vcmp.eq.f32.partialorder %v1837, 8.507059e+37
        %v1839 = vand.u32 %v1826, 2147483648
        %v1840 = vor.u32 1.1754944e-38, %v1839
        %v1841 = vsel %vm1838, %v1840, %v1836
        %v1842 = vmul.f32 1.0, %v1841
        %v1843 = vrcp.pop %v1827
        %v1844 = vmul.f32 %v1827, %v1843
        %v1845 = vsub.f32 1.0, %v1844
        %v1846 = vmul.f32 %v1843, %v1845
        %v1847 = vadd.f32 %v1843, %v1846
        %vm1848 = vweird.f32 %v1827
        %vm1849 = vweird.f32 %v1843
        %vm1850 = vmor %vm1848, %vm1849
        %v1851 = vsel %vm1850, %v1843, %v1847
        %v1852 = vand.u32 2147483647, %v1827
        %vm1853 = vcmp.eq.f32.partialorder %v1852, 8.507059e+37
        %v1854 = vand.u32 %v1827, 2147483648
        %v1855 = vor.u32 1.1754944e-38, %v1854
        %v1856 = vsel %vm1853, %v1855, %v1851
        %v1857 = vmul.f32 1.0, %v1856
        %v1858 = vsel %vm312, %v1818, %v1842
        %v1859 = vsel %vm312, %v1819, %v1857
        %v1860 = vmul.f32 %v1858, %v1767
        %v1861 = vmul.f32 %v1859, %v1768
        %1864 = vrot.lane.b32.xlu0 %v1858, 64
        %v1865 = vpop.permute.xlu0 %1864
        %1866 = vrot.lane.b32.xlu0 %v1859, 64
        %v1867 = vpop.permute.xlu0 %1866
        %v1870 = vmul.f32 %v1858, %v1865
        %v1871 = vmul.f32 %v1859, %v1867
        %1874 = vrot.lane.b32.xlu0 %v1870, 32
        %v1875 = vpop.permute.xlu0 %1874
        %1876 = vrot.lane.b32.xlu0 %v1871, 32
        %v1877 = vpop.permute.xlu0 %1876
        %v1880 = vadd.f32 %v1860, %v1875
        %v1881 = vadd.f32 %v1861, %v1877
        %v1882 = vtanh.pop %v1880
        %v1883 = vtanh.pop %v1881
        %1886 = vrot.lane.b32.xlu0 %v1882, 64
        %v1887 = vpop.permute.xlu0 %1886
        %1888 = vrot.lane.b32.xlu0 %v1883, 64
        %v1889 = vpop.permute.xlu0 %1888
        %v1892 = vmul.f32 %v1858, %v1887
        %v1893 = vmul.f32 %v1859, %v1889
        %v1894 = vld [vmem:[#allocation2 + $0x30] sm:$0xff]
        %v1895 = vld [vmem:[#allocation2 + $0x38] sm:$0xff]
        %1898 = vrot.lane.b32.xlu0 %v1892, 32
        %v1899 = vpop.permute.xlu0 %1898
        %1900 = vrot.lane.b32.xlu0 %v1893, 32
        %v1901 = vpop.permute.xlu0 %1900
        %v1902 = vsel %vm474, %v1899, 0
        %v1904 = vsel %vm474, %v1901, 0
        %1906 = vmatpush.msra.mxu0 0.0
        %1907 = vmatpush.msra.mxu0 0.0
        %1908 = vmatpush.msra.mxu0 0.0
        %1909 = vmatpush.msra.mxu0 0.0
        %1910 = vmatpush.msra.mxu0 0.0
        %1911 = vmatpush.msra.mxu0 0.0
        %1912 = vmatpush.msra.mxu0 0.0
        %1913 = vmatpush.msra.mxu0 0.0
        %1914 = vmatpush.msra.mxu0 0.0
        %1915 = vmatpush.msra.mxu0 0.0
        %1916 = vmatpush.msra.mxu0 0.0
        %1917 = vmatpush.msra.mxu0 0.0
        %1918 = vmatpush.msra.mxu0 %v1415
        %1919 = vmatpush.msra.mxu0 %v1414
        %1920 = vmatpush.msra.mxu0 %v1413
        %1921 = vmatpush.msra.mxu0 %v1412
        %1922 = vmatmul.f32.gmra.mxu0 %v1902
        %v1923 = vpop.f32.mrf.mxu0
        %v1924 = vadd.f32 0.0, %v1923
        %1925 = vmatmul.f32.gmra.mxu0 %v1904
        %v1926 = vpop.f32.mrf.mxu0
        %v1927 = vadd.f32 0.0, %v1926
        %1928 = vdwg.mxu0
        %v1929 = vadd.f32 %v1894, %v1924
        %v1930 = vadd.f32 %v1895, %v1927
        %v1931 = vtanh.pop %v1929
        %v1932 = vtanh.pop %v1930
        %v1933 = vxor.u32 %v1929, 2147483648
        %v1934 = vxor.u32 %v1930, 2147483648
        %v1935 = vmul.f32 %v1933, 1.442695
        %v1936 = vpow.pop %v1935
        %v1937 = vmul.f32 %v1934, 1.442695
        %v1938 = vpow.pop %v1937
        %v1939 = vadd.f32 %v1936, 1.0
        %v1940 = vadd.f32 %v1938, 1.0
        %v1941 = vrcp.pop %v1939
        %v1942 = vmul.f32 %v1939, %v1941
        %v1943 = vsub.f32 1.0, %v1942
        %v1944 = vmul.f32 %v1941, %v1943
        %v1945 = vadd.f32 %v1941, %v1944
        %vm1946 = vweird.f32 %v1939
        %vm1947 = vweird.f32 %v1941
        %vm1948 = vmor %vm1946, %vm1947
        %v1949 = vsel %vm1948, %v1941, %v1945
        %v1950 = vand.u32 2147483647, %v1939
        %vm1951 = vcmp.eq.f32.partialorder %v1950, 8.507059e+37
        %v1952 = vand.u32 %v1939, 2147483648
        %v1953 = vor.u32 1.1754944e-38, %v1952
        %v1954 = vsel %vm1951, %v1953, %v1949
        %v1955 = vmul.f32 1.0, %v1954
        %v1956 = vrcp.pop %v1940
        %v1957 = vmul.f32 %v1940, %v1956
        %v1958 = vsub.f32 1.0, %v1957
        %v1959 = vmul.f32 %v1956, %v1958
        %v1960 = vadd.f32 %v1956, %v1959
        %vm1961 = vweird.f32 %v1940
        %vm1962 = vweird.f32 %v1956
        %vm1963 = vmor %vm1961, %vm1962
        %v1964 = vsel %vm1963, %v1956, %v1960
        %v1965 = vand.u32 2147483647, %v1940
        %vm1966 = vcmp.eq.f32.partialorder %v1965, 8.507059e+37
        %v1967 = vand.u32 %v1940, 2147483648
        %v1968 = vor.u32 1.1754944e-38, %v1967
        %v1969 = vsel %vm1966, %v1968, %v1964
        %v1970 = vmul.f32 1.0, %v1969
        %v1971 = vsel %vm312, %v1931, %v1955
        %v1972 = vsel %vm312, %v1932, %v1970
        %v1973 = vmul.f32 %v1971, %v1880
        %v1974 = vmul.f32 %v1972, %v1881
        %1977 = vrot.lane.b32.xlu0 %v1971, 64
        %v1978 = vpop.permute.xlu0 %1977
        %1979 = vrot.lane.b32.xlu0 %v1972, 64
        %v1980 = vpop.permute.xlu0 %1979
        %v1983 = vmul.f32 %v1971, %v1978
        %v1984 = vmul.f32 %v1972, %v1980
        %1987 = vrot.lane.b32.xlu0 %v1983, 32
        %v1988 = vpop.permute.xlu0 %1987
        %1989 = vrot.lane.b32.xlu0 %v1984, 32
        %v1990 = vpop.permute.xlu0 %1989
        %v1993 = vadd.f32 %v1973, %v1988
        %v1994 = vadd.f32 %v1974, %v1990
        %v1995 = vtanh.pop %v1993
        %v1996 = vtanh.pop %v1994
        %1999 = vrot.lane.b32.xlu0 %v1995, 64
        %v2000 = vpop.permute.xlu0 %1999
        %2001 = vrot.lane.b32.xlu0 %v1996, 64
        %v2002 = vpop.permute.xlu0 %2001
        %v2005 = vmul.f32 %v1971, %v2000
        %v2006 = vmul.f32 %v1972, %v2002
        %v2007 = vld [vmem:[#allocation2 + $0x40] sm:$0xff]
        %v2008 = vld [vmem:[#allocation2 + $0x48] sm:$0xff]
        %2011 = vrot.lane.b32.xlu0 %v2005, 32
        %v2012 = vpop.permute.xlu0 %2011
        %2013 = vrot.lane.b32.xlu0 %v2006, 32
        %v2014 = vpop.permute.xlu0 %2013
        %v2015 = vsel %vm474, %v2012, 0
        %v2017 = vsel %vm474, %v2014, 0
        %2019 = vmatpush.msra.mxu0 0.0
        %2020 = vmatpush.msra.mxu0 0.0
        %2021 = vmatpush.msra.mxu0 0.0
        %2022 = vmatpush.msra.mxu0 0.0
        %2023 = vmatpush.msra.mxu0 0.0
        %2024 = vmatpush.msra.mxu0 0.0
        %2025 = vmatpush.msra.mxu0 0.0
        %2026 = vmatpush.msra.mxu0 0.0
        %2027 = vmatpush.msra.mxu0 0.0
        %2028 = vmatpush.msra.mxu0 0.0
        %2029 = vmatpush.msra.mxu0 0.0
        %2030 = vmatpush.msra.mxu0 0.0
        %2031 = vmatpush.msra.mxu0 %v1415
        %2032 = vmatpush.msra.mxu0 %v1414
        %2033 = vmatpush.msra.mxu0 %v1413
        %2034 = vmatpush.msra.mxu0 %v1412
        %2035 = vmatmul.f32.gmra.mxu0 %v2015
        %v2036 = vpop.f32.mrf.mxu0
        %v2037 = vadd.f32 0.0, %v2036
        %2038 = vmatmul.f32.gmra.mxu0 %v2017
        %v2039 = vpop.f32.mrf.mxu0
        %v2040 = vadd.f32 0.0, %v2039
        %2041 = vdwg.mxu0
        %v2042 = vadd.f32 %v2007, %v2037
        %v2043 = vadd.f32 %v2008, %v2040
        %v2044 = vtanh.pop %v2042
        %v2045 = vtanh.pop %v2043
        %v2046 = vxor.u32 %v2042, 2147483648
        %v2047 = vxor.u32 %v2043, 2147483648
        %v2048 = vmul.f32 %v2046, 1.442695
        %v2049 = vpow.pop %v2048
        %v2050 = vmul.f32 %v2047, 1.442695
        %v2051 = vpow.pop %v2050
        %v2052 = vadd.f32 %v2049, 1.0
        %v2053 = vadd.f32 %v2051, 1.0
        %v2054 = vrcp.pop %v2052
        %v2055 = vmul.f32 %v2052, %v2054
        %v2056 = vsub.f32 1.0, %v2055
        %v2057 = vmul.f32 %v2054, %v2056
        %v2058 = vadd.f32 %v2054, %v2057
        %vm2059 = vweird.f32 %v2052
        %vm2060 = vweird.f32 %v2054
        %vm2061 = vmor %vm2059, %vm2060
        %v2062 = vsel %vm2061, %v2054, %v2058
        %v2063 = vand.u32 2147483647, %v2052
        %vm2064 = vcmp.eq.f32.partialorder %v2063, 8.507059e+37
        %v2065 = vand.u32 %v2052, 2147483648
        %v2066 = vor.u32 1.1754944e-38, %v2065
        %v2067 = vsel %vm2064, %v2066, %v2062
        %v2068 = vmul.f32 1.0, %v2067
        %v2069 = vrcp.pop %v2053
        %v2070 = vmul.f32 %v2053, %v2069
        %v2071 = vsub.f32 1.0, %v2070
        %v2072 = vmul.f32 %v2069, %v2071
        %v2073 = vadd.f32 %v2069, %v2072
        %vm2074 = vweird.f32 %v2053
        %vm2075 = vweird.f32 %v2069
        %vm2076 = vmor %vm2074, %vm2075
        %v2077 = vsel %vm2076, %v2069, %v2073
        %v2078 = vand.u32 2147483647, %v2053
        %vm2079 = vcmp.eq.f32.partialorder %v2078, 8.507059e+37
        %v2080 = vand.u32 %v2053, 2147483648
        %v2081 = vor.u32 1.1754944e-38, %v2080
        %v2082 = vsel %vm2079, %v2081, %v2077
        %v2083 = vmul.f32 1.0, %v2082
        %v2084 = vsel %vm312, %v2044, %v2068
        %v2085 = vsel %vm312, %v2045, %v2083
        %v2086 = vmul.f32 %v2084, %v1993
        %v2087 = vmul.f32 %v2085, %v1994
        %2090 = vrot.lane.b32.xlu0 %v2084, 64
        %v2091 = vpop.permute.xlu0 %2090
        %2092 = vrot.lane.b32.xlu0 %v2085, 64
        %v2093 = vpop.permute.xlu0 %2092
        %v2096 = vmul.f32 %v2084, %v2091
        %v2097 = vmul.f32 %v2085, %v2093
        %2100 = vrot.lane.b32.xlu0 %v2096, 32
        %v2101 = vpop.permute.xlu0 %2100
        %2102 = vrot.lane.b32.xlu0 %v2097, 32
        %v2103 = vpop.permute.xlu0 %2102
        %v2106 = vadd.f32 %v2086, %v2101
        %v2107 = vadd.f32 %v2087, %v2103
        %v2108 = vtanh.pop %v2106
        %v2109 = vtanh.pop %v2107
        %2112 = vrot.lane.b32.xlu0 %v2108, 64
        %v2113 = vpop.permute.xlu0 %2112
        %2114 = vrot.lane.b32.xlu0 %v2109, 64
        %v2115 = vpop.permute.xlu0 %2114
        %v2118 = vmul.f32 %v2084, %v2113
        %v2119 = vmul.f32 %v2085, %v2115
        %v2120 = vld [vmem:[#allocation2 + $0x50] sm:$0xff]
        %v2121 = vld [vmem:[#allocation2 + $0x58] sm:$0xff]
        %2124 = vrot.lane.b32.xlu0 %v2118, 32
        %v2125 = vpop.permute.xlu0 %2124
        %2126 = vrot.lane.b32.xlu0 %v2119, 32
        %v2127 = vpop.permute.xlu0 %2126
        %v2128 = vsel %vm474, %v2125, 0
        %v2130 = vsel %vm474, %v2127, 0
        %2132 = vmatpush.msra.mxu0 0.0
        %2133 = vmatpush.msra.mxu0 0.0
        %2134 = vmatpush.msra.mxu0 0.0
        %2135 = vmatpush.msra.mxu0 0.0
        %2136 = vmatpush.msra.mxu0 0.0
        %2137 = vmatpush.msra.mxu0 0.0
        %2138 = vmatpush.msra.mxu0 0.0
        %2139 = vmatpush.msra.mxu0 0.0
        %2140 = vmatpush.msra.mxu0 0.0
        %2141 = vmatpush.msra.mxu0 0.0
        %2142 = vmatpush.msra.mxu0 0.0
        %2143 = vmatpush.msra.mxu0 0.0
        %2144 = vmatpush.msra.mxu0 %v1415
        %2145 = vmatpush.msra.mxu0 %v1414
        %2146 = vmatpush.msra.mxu0 %v1413
        %2147 = vmatpush.msra.mxu0 %v1412
        %2148 = vmatmul.f32.gmra.mxu0 %v2128
        %v2149 = vpop.f32.mrf.mxu0
        %v2150 = vadd.f32 0.0, %v2149
        %2151 = vmatmul.f32.gmra.mxu0 %v2130
        %v2152 = vpop.f32.mrf.mxu0
        %v2153 = vadd.f32 0.0, %v2152
        %2154 = vdwg.mxu0
        %v2155 = vadd.f32 %v2120, %v2150
        %v2156 = vadd.f32 %v2121, %v2153
        %v2157 = vtanh.pop %v2155
        %v2158 = vtanh.pop %v2156
        %v2159 = vxor.u32 %v2155, 2147483648
        %v2160 = vxor.u32 %v2156, 2147483648
        %v2161 = vmul.f32 %v2159, 1.442695
        %v2162 = vpow.pop %v2161
        %v2163 = vmul.f32 %v2160, 1.442695
        %v2164 = vpow.pop %v2163
        %v2165 = vadd.f32 %v2162, 1.0
        %v2166 = vadd.f32 %v2164, 1.0
        %v2167 = vrcp.pop %v2165
        %v2168 = vmul.f32 %v2165, %v2167
        %v2169 = vsub.f32 1.0, %v2168
        %v2170 = vmul.f32 %v2167, %v2169
        %v2171 = vadd.f32 %v2167, %v2170
        %vm2172 = vweird.f32 %v2165
        %vm2173 = vweird.f32 %v2167
        %vm2174 = vmor %vm2172, %vm2173
        %v2175 = vsel %vm2174, %v2167, %v2171
        %v2176 = vand.u32 2147483647, %v2165
        %vm2177 = vcmp.eq.f32.partialorder %v2176, 8.507059e+37
        %v2178 = vand.u32 %v2165, 2147483648
        %v2179 = vor.u32 1.1754944e-38, %v2178
        %v2180 = vsel %vm2177, %v2179, %v2175
        %v2181 = vmul.f32 1.0, %v2180
        %v2182 = vrcp.pop %v2166
        %v2183 = vmul.f32 %v2166, %v2182
        %v2184 = vsub.f32 1.0, %v2183
        %v2185 = vmul.f32 %v2182, %v2184
        %v2186 = vadd.f32 %v2182, %v2185
        %vm2187 = vweird.f32 %v2166
        %vm2188 = vweird.f32 %v2182
        %vm2189 = vmor %vm2187, %vm2188
        %v2190 = vsel %vm2189, %v2182, %v2186
        %v2191 = vand.u32 2147483647, %v2166
        %vm2192 = vcmp.eq.f32.partialorder %v2191, 8.507059e+37
        %v2193 = vand.u32 %v2166, 2147483648
        %v2194 = vor.u32 1.1754944e-38, %v2193
        %v2195 = vsel %vm2192, %v2194, %v2190
        %v2196 = vmul.f32 1.0, %v2195
        %v2197 = vsel %vm312, %v2157, %v2181
        %v2198 = vsel %vm312, %v2158, %v2196
        %v2199 = vmul.f32 %v2197, %v2106
        %v2200 = vmul.f32 %v2198, %v2107
        %2203 = vrot.lane.b32.xlu0 %v2197, 64
        %v2204 = vpop.permute.xlu0 %2203
        %2205 = vrot.lane.b32.xlu0 %v2198, 64
        %v2206 = vpop.permute.xlu0 %2205
        %v2209 = vmul.f32 %v2197, %v2204
        %v2210 = vmul.f32 %v2198, %v2206
        %2213 = vrot.lane.b32.xlu0 %v2209, 32
        %v2214 = vpop.permute.xlu0 %2213
        %2215 = vrot.lane.b32.xlu0 %v2210, 32
        %v2216 = vpop.permute.xlu0 %2215
        %v2219 = vadd.f32 %v2199, %v2214
        %v2220 = vadd.f32 %v2200, %v2216
        %v2221 = vtanh.pop %v2219
        %v2222 = vtanh.pop %v2220
        %2225 = vrot.lane.b32.xlu0 %v2221, 64
        %v2226 = vpop.permute.xlu0 %2225
        %2227 = vrot.lane.b32.xlu0 %v2222, 64
        %v2228 = vpop.permute.xlu0 %2227
        %v2231 = vmul.f32 %v2197, %v2226
        %v2232 = vmul.f32 %v2198, %v2228
        %v2233 = vld [vmem:[#allocation2 + $0x60] sm:$0xff]
        %v2234 = vld [vmem:[#allocation2 + $0x68] sm:$0xff]
        %2237 = vrot.lane.b32.xlu0 %v2231, 32
        %v2238 = vpop.permute.xlu0 %2237
        %2239 = vrot.lane.b32.xlu0 %v2232, 32
        %v2240 = vpop.permute.xlu0 %2239
        %v2241 = vsel %vm474, %v2238, 0
        %v2243 = vsel %vm474, %v2240, 0
        %2245 = vmatpush.msra.mxu0 0.0
        %2246 = vmatpush.msra.mxu0 0.0
        %2247 = vmatpush.msra.mxu0 0.0
        %2248 = vmatpush.msra.mxu0 0.0
        %2249 = vmatpush.msra.mxu0 0.0
        %2250 = vmatpush.msra.mxu0 0.0
        %2251 = vmatpush.msra.mxu0 0.0
        %2252 = vmatpush.msra.mxu0 0.0
        %2253 = vmatpush.msra.mxu0 0.0
        %2254 = vmatpush.msra.mxu0 0.0
        %2255 = vmatpush.msra.mxu0 0.0
        %2256 = vmatpush.msra.mxu0 0.0
        %2257 = vmatpush.msra.mxu0 %v1415
        %2258 = vmatpush.msra.mxu0 %v1414
        %2259 = vmatpush.msra.mxu0 %v1413
        %2260 = vmatpush.msra.mxu0 %v1412
        %2261 = vmatmul.f32.gmra.mxu0 %v2241
        %v2262 = vpop.f32.mrf.mxu0
        %v2263 = vadd.f32 0.0, %v2262
        %2264 = vmatmul.f32.gmra.mxu0 %v2243
        %v2265 = vpop.f32.mrf.mxu0
        %v2266 = vadd.f32 0.0, %v2265
        %2267 = vdwg.mxu0
        %v2268 = vadd.f32 %v2233, %v2263
        %v2269 = vadd.f32 %v2234, %v2266
        %v2270 = vtanh.pop %v2268
        %v2271 = vtanh.pop %v2269
        %v2272 = vxor.u32 %v2268, 2147483648
        %v2273 = vxor.u32 %v2269, 2147483648
        %v2274 = vmul.f32 %v2272, 1.442695
        %v2275 = vpow.pop %v2274
        %v2276 = vmul.f32 %v2273, 1.442695
        %v2277 = vpow.pop %v2276
        %v2278 = vadd.f32 %v2275, 1.0
        %v2279 = vadd.f32 %v2277, 1.0
        %v2280 = vrcp.pop %v2278
        %v2281 = vmul.f32 %v2278, %v2280
        %v2282 = vsub.f32 1.0, %v2281
        %v2283 = vmul.f32 %v2280, %v2282
        %v2284 = vadd.f32 %v2280, %v2283
        %vm2285 = vweird.f32 %v2278
        %vm2286 = vweird.f32 %v2280
        %vm2287 = vmor %vm2285, %vm2286
        %v2288 = vsel %vm2287, %v2280, %v2284
        %v2289 = vand.u32 2147483647, %v2278
        %vm2290 = vcmp.eq.f32.partialorder %v2289, 8.507059e+37
        %v2291 = vand.u32 %v2278, 2147483648
        %v2292 = vor.u32 1.1754944e-38, %v2291
        %v2293 = vsel %vm2290, %v2292, %v2288
        %v2294 = vmul.f32 1.0, %v2293
        %v2295 = vrcp.pop %v2279
        %v2296 = vmul.f32 %v2279, %v2295
        %v2297 = vsub.f32 1.0, %v2296
        %v2298 = vmul.f32 %v2295, %v2297
        %v2299 = vadd.f32 %v2295, %v2298
        %vm2300 = vweird.f32 %v2279
        %vm2301 = vweird.f32 %v2295
        %vm2302 = vmor %vm2300, %vm2301
        %v2303 = vsel %vm2302, %v2295, %v2299
        %v2304 = vand.u32 2147483647, %v2279
        %vm2305 = vcmp.eq.f32.partialorder %v2304, 8.507059e+37
        %v2306 = vand.u32 %v2279, 2147483648
        %v2307 = vor.u32 1.1754944e-38, %v2306
        %v2308 = vsel %vm2305, %v2307, %v2303
        %v2309 = vmul.f32 1.0, %v2308
        %v2310 = vsel %vm312, %v2270, %v2294
        %v2311 = vsel %vm312, %v2271, %v2309
        %v2312 = vmul.f32 %v2310, %v2219
        %v2313 = vmul.f32 %v2311, %v2220
        %2316 = vrot.lane.b32.xlu0 %v2310, 64
        %v2317 = vpop.permute.xlu0 %2316
        %2318 = vrot.lane.b32.xlu0 %v2311, 64
        %v2319 = vpop.permute.xlu0 %2318
        %v2322 = vmul.f32 %v2310, %v2317
        %v2323 = vmul.f32 %v2311, %v2319
        %2326 = vrot.lane.b32.xlu0 %v2322, 32
        %v2327 = vpop.permute.xlu0 %2326
        %2328 = vrot.lane.b32.xlu0 %v2323, 32
        %v2329 = vpop.permute.xlu0 %2328
        %v2332 = vadd.f32 %v2312, %v2327
        %v2333 = vadd.f32 %v2313, %v2329
        %v2334 = vtanh.pop %v2332
        %v2335 = vtanh.pop %v2333
        %2338 = vrot.lane.b32.xlu0 %v2334, 64
        %v2339 = vpop.permute.xlu0 %2338
        %2340 = vrot.lane.b32.xlu0 %v2335, 64
        %v2341 = vpop.permute.xlu0 %2340
        %v2344 = vmul.f32 %v2310, %v2339
        %v2345 = vmul.f32 %v2311, %v2341
        %v2346 = vld [vmem:[#allocation2 + $0x70] sm:$0xff]
        %v2347 = vld [vmem:[#allocation2 + $0x78] sm:$0xff]
        %2350 = vrot.lane.b32.xlu0 %v2344, 32
        %v2351 = vpop.permute.xlu0 %2350
        %2352 = vrot.lane.b32.xlu0 %v2345, 32
        %v2353 = vpop.permute.xlu0 %2352
        %v2354 = vsel %vm474, %v2351, 0
        %v2356 = vsel %vm474, %v2353, 0
        %2358 = vmatpush.msra.mxu0 0.0
        %2359 = vmatpush.msra.mxu0 0.0
        %2360 = vmatpush.msra.mxu0 0.0
        %2361 = vmatpush.msra.mxu0 0.0
        %2362 = vmatpush.msra.mxu0 0.0
        %2363 = vmatpush.msra.mxu0 0.0
        %2364 = vmatpush.msra.mxu0 0.0
        %2365 = vmatpush.msra.mxu0 0.0
        %2366 = vmatpush.msra.mxu0 0.0
        %2367 = vmatpush.msra.mxu0 0.0
        %2368 = vmatpush.msra.mxu0 0.0
        %2369 = vmatpush.msra.mxu0 0.0
        %2370 = vmatpush.msra.mxu0 %v1415
        %2371 = vmatpush.msra.mxu0 %v1414
        %2372 = vmatpush.msra.mxu0 %v1413
        %2373 = vmatpush.msra.mxu0 %v1412
        %2374 = vmatmul.f32.gmra.mxu0 %v2354
        %v2375 = vpop.f32.mrf.mxu0
        %v2376 = vadd.f32 0.0, %v2375
        %2377 = vmatmul.f32.gmra.mxu0 %v2356
        %v2378 = vpop.f32.mrf.mxu0
        %v2379 = vadd.f32 0.0, %v2378
        %2380 = vdwg.mxu0
        %v2381 = vadd.f32 %v2346, %v2376
        %v2382 = vadd.f32 %v2347, %v2379
        %v2383 = vtanh.pop %v2381
        %v2384 = vtanh.pop %v2382
        %v2385 = vxor.u32 %v2381, 2147483648
        %v2386 = vxor.u32 %v2382, 2147483648
        %v2387 = vmul.f32 %v2385, 1.442695
        %v2388 = vpow.pop %v2387
        %v2389 = vmul.f32 %v2386, 1.442695
        %v2390 = vpow.pop %v2389
        %v2391 = vadd.f32 %v2388, 1.0
        %v2392 = vadd.f32 %v2390, 1.0
        %v2393 = vrcp.pop %v2391
        %v2394 = vmul.f32 %v2391, %v2393
        %v2395 = vsub.f32 1.0, %v2394
        %v2396 = vmul.f32 %v2393, %v2395
        %v2397 = vadd.f32 %v2393, %v2396
        %vm2398 = vweird.f32 %v2391
        %vm2399 = vweird.f32 %v2393
        %vm2400 = vmor %vm2398, %vm2399
        %v2401 = vsel %vm2400, %v2393, %v2397
        %v2402 = vand.u32 2147483647, %v2391
        %vm2403 = vcmp.eq.f32.partialorder %v2402, 8.507059e+37
        %v2404 = vand.u32 %v2391, 2147483648
        %v2405 = vor.u32 1.1754944e-38, %v2404
        %v2406 = vsel %vm2403, %v2405, %v2401
        %v2407 = vmul.f32 1.0, %v2406
        %v2408 = vrcp.pop %v2392
        %v2409 = vmul.f32 %v2392, %v2408
        %v2410 = vsub.f32 1.0, %v2409
        %v2411 = vmul.f32 %v2408, %v2410
        %v2412 = vadd.f32 %v2408, %v2411
        %vm2413 = vweird.f32 %v2392
        %vm2414 = vweird.f32 %v2408
        %vm2415 = vmor %vm2413, %vm2414
        %v2416 = vsel %vm2415, %v2408, %v2412
        %v2417 = vand.u32 2147483647, %v2392
        %vm2418 = vcmp.eq.f32.partialorder %v2417, 8.507059e+37
        %v2419 = vand.u32 %v2392, 2147483648
        %v2420 = vor.u32 1.1754944e-38, %v2419
        %v2421 = vsel %vm2418, %v2420, %v2416
        %v2422 = vmul.f32 1.0, %v2421
        %v2423 = vsel %vm312, %v2383, %v2407
        %v2424 = vsel %vm312, %v2384, %v2422
        %v2425 = vmul.f32 %v2423, %v2332
        %v2426 = vmul.f32 %v2424, %v2333
        %2429 = vrot.lane.b32.xlu0 %v2423, 64
        %v2430 = vpop.permute.xlu0 %2429
        %2431 = vrot.lane.b32.xlu0 %v2424, 64
        %v2432 = vpop.permute.xlu0 %2431
        %v2435 = vmul.f32 %v2423, %v2430
        %v2436 = vmul.f32 %v2424, %v2432
        %2439 = vrot.lane.b32.xlu0 %v2435, 32
        %v2440 = vpop.permute.xlu0 %2439
        %2441 = vrot.lane.b32.xlu0 %v2436, 32
        %v2442 = vpop.permute.xlu0 %2441
        %v2445 = vadd.f32 %v2425, %v2440
        %v2446 = vadd.f32 %v2426, %v2442
        %v2447 = vtanh.pop %v2445
        %v2448 = vtanh.pop %v2446
        %2451 = vrot.lane.b32.xlu0 %v2447, 64
        %v2452 = vpop.permute.xlu0 %2451
        %2453 = vrot.lane.b32.xlu0 %v2448, 64
        %v2454 = vpop.permute.xlu0 %2453
        %v2457 = vmul.f32 %v2423, %v2452
        %v2458 = vmul.f32 %v2424, %v2454
        %2461 = vrot.lane.b32.xlu0 %v2457, 32
        %v2462 = vpop.permute.xlu0 %2461
        %2463 = vrot.lane.b32.xlu0 %v2458, 32
        %v2464 = vpop.permute.xlu0 %2463
        %2467 = vst.msk [vmem:[%s296] sm:$0xff] %vm474, %v2462
        %2468 = vst.msk [vmem:[%s296 + $0x8] sm:$0xff] %vm474, %v2464
        %s2469 = sand.u32 %s197, 1
        %s2470 = scalar_lea.sflag [#allocation5], %s2469
        %s2471 = sand.u32 %s197, 1
        %s2472 = smul.addr %s2471, 16
        %s2473 = scalar_lea.vmem [#allocation4], %s2472
        // Predicated region
        $region49: #{tpu_custom_call.1} parent=47 // pred_check
          %p2474 = pneg %p207
        $region50: #{tpu_custom_call.1} parent=47 // pred_check_branch
          %2476 = sbr.rel (%p2474) target = $region52
        $region51: #{tpu_custom_call.1} parent=47 // pred_region
          %s2477 = smul.u32 2, %s26
          %2479 = vsyncadd %s2470, 0
          %s2480 = smul.addr %s25, 2
          %s2481 = sadd.s32 %s2477, %s2480
          %s2482 = smul.addr %s2481, 8
          %s2483 = scalar_lea.hbm %s7, %s2482
          %s2484 = sshll.u32 %s2473, 4
          %s2485 = int_to_ptr.vmem [resolvable:$true] %s2484
          %s2486 = sshll.u32 %s2483, 4
          %s2487 = int_to_ptr.hbm [resolvable:$true] %s2486
          %2492 = dma.vmem_to_hbm [thread:$0]  %s2485, 256, %s2487, %s2470, 128, 128, 8
        $region52: #{tpu_custom_call.1} parent=47 // pred_fallthru
          _
      $region48: #{tpu_custom_call.1} parent=5 // pred_fallthru
        _
      %p2493 = scmp.le.s32.totalorder 2, %s16
      // Predicated region
      $region53: #{tpu_custom_call.1} parent=5 // pred_check
        %p2494 = pneg %p2493
      $region54: #{tpu_custom_call.1} parent=5 // pred_check_branch
        %2496 = sbr.rel (%p2494) target = $region56
      $region55: #{tpu_custom_call.1} parent=5 // pred_region
        %s2497 = ssub.s32 %s16, 2
        // Predicated region
        $region57: #{tpu_custom_call.1} parent=55 // pred_check
          %p2498 = pneg %p213
        $region58: #{tpu_custom_call.1} parent=55 // pred_check_branch
          %2500 = sbr.rel (%p2498) target = $region60
        $region59: #{tpu_custom_call.1} parent=55 // pred_region
          %s2501 = sand.u32 %s198, 1
          %s2502 = scalar_lea.sflag [#allocation5], %s2501
          %s2503 = sand.u32 %s198, 1
          %s2504 = smul.addr %s2503, 16
          %s2505 = scalar_lea.vmem [#allocation4], %s2504
          %2507 = dma.done %s2502, 256
        $region60: #{tpu_custom_call.1} parent=55 // pred_fallthru
          _
      $region56: #{tpu_custom_call.1} parent=5 // pred_fallthru
        _
    $region6: #{tpu_custom_call.1} parent=1 // loop_footer
      %s20 = sadd.s32 1, %s16
    $region7: #{tpu_custom_call.1} parent=1 // loop_footer_branch
      %15 = sbr.rel target = $region3
    $region8: #{tpu_custom_call.1} parent=1 // loop_exit
      _
    %2508 = vsyncpa [#allocation5], 1
    %s2509 = scalar_lea.sflag [#allocation5], 1
    %2510 = vsyncpa %s2509, 1

</llo_original>
